<compile_context>
chip_gen: v5e
topology: v5e:2x2
jax: 0.10.0
libtpu: 0.0.40
codegen_flags: <defaults>
</compile_context>

<pallas_src>
import functools

import numpy as np
import jax
import jax.numpy as jnp
from jax.experimental import pallas as pl
from jax.experimental.pallas import tpu as pltpu

_EPS = 1e-6
# Above the default scoped-VMEM limits (16/32 MiB) but below physical VMEM on
# every generation (128 MiB v5e/v6e, 64 MiB v7x).
_VMEM_LIMIT_BYTES = 48 * 1024 * 1024


def _compiler_params():
    return pltpu.CompilerParams(
        dimension_semantics=("parallel", "parallel"),
        vmem_limit_bytes=_VMEM_LIMIT_BYTES,
    )


def _approx_recip(x):
    if hasattr(pl, "reciprocal"):
        return pl.reciprocal(x, approx=True)   # EUP slot, off the VALU path
    return 1.0 / x


def _layernorm_f32(xf):
    """LayerNorm (no affine) on an f32 array; biased variance like torch LN."""
    mean = jnp.mean(xf, axis=-1, keepdims=True)
    xc = xf - mean
    var = jnp.mean(xc * xc, axis=-1, keepdims=True)
    return xc * jax.lax.rsqrt(var + _EPS)


def _row_modulation(sel_ref, mod_ref, C):
    """Rebuild per-row (shift, scale, gate) from the per-frame table.

    sel_ref: (1, rows, T) one-hot selector reproducing torch's
             `.repeat(1, N//T, 1, 1)` broadcast (row n -> frame n % T).
    mod_ref: (1, T, 3C) per-frame [shift | scale | gate].
    """
    modr = jnp.dot(sel_ref[0], mod_ref[0].astype(jnp.float32),
                   preferred_element_type=jnp.float32)          # (rows, 3C)
    return modr[:, :C], modr[:, C:2 * C], modr[:, 2 * C:]


def _sdpa_out(q, k, v, wo, bo, *, heads, scale):
    """Head-batched SDPA + output projection. q/k/v are f32 (S, C). Returns f32."""
    cdt = wo.dtype
    C = q.shape[-1]
    dh = C // heads

    def split_heads(a):                                   # (S, C) -> (H, S, dh)
        return jnp.concatenate(
            [a[None, :, h * dh:(h + 1) * dh] for h in range(heads)], axis=0
        ).astype(cdt)

    qh, kh, vh = split_heads(q), split_heads(k), split_heads(v)
    s = jnp.einsum("hqd,hkd->hqk", qh, kh,
                   preferred_element_type=jnp.float32) * scale
    m = jnp.max(s, axis=-1, keepdims=True)
    p = jnp.exp(s - m)
    l = jnp.sum(p, axis=-1, keepdims=True)
    p = (p * _approx_recip(l)).astype(cdt)
    o = jnp.einsum("hqk,hkd->hqd", p, vh, preferred_element_type=jnp.float32)
    o = jnp.concatenate([o[h] for h in range(heads)], axis=-1).astype(cdt)
    return jnp.dot(o, wo[...], preferred_element_type=jnp.float32) + bo[...]


def _self_attn(x_m, wqkv, bqkv, wo, bo, *, heads, scale):
    """diffusers Attention(bias=True, no qk_norm) self-attention, packed QKV."""
    C = x_m.shape[-1]
    qkv = jnp.dot(x_m, wqkv[...], preferred_element_type=jnp.float32) + bqkv[...]
    return _sdpa_out(qkv[:, :C], qkv[:, C:2 * C], qkv[:, 2 * C:], wo, bo,
                     heads=heads, scale=scale)


def _cross_attn(xq, ykv, wq, bq, wkv, bkv, wo, bo, *, heads, scale):
    C = xq.shape[-1]
    q = jnp.dot(xq, wq[...], preferred_element_type=jnp.float32) + bq[...]
    kv = jnp.dot(ykv, wkv[...], preferred_element_type=jnp.float32) + bkv[...]
    return _sdpa_out(q, kv[:, :C], kv[:, C:], wo, bo, heads=heads, scale=scale)


def _mlp_branch(x_m, w1, b1, w2, b2):
    h = jnp.dot(x_m, w1[...], preferred_element_type=jnp.float32) + b1[...]
    h = jax.nn.gelu(h, approximate=True).astype(w2.dtype)       # tanh approx
    return jnp.dot(h, w2[...], preferred_element_type=jnp.float32) + b2[...]


# --------------------------------------------------------------------------
# Fused Pallas kernels (one grid step == one (batch, frame / spatial) tile)
# --------------------------------------------------------------------------

def _self_attn_kernel(x_ref, sel_ref, mod_ref, wqkv, bqkv, wo, bo, o_ref, *,
                      heads, scale):
    """Fused: LayerNorm + t2i_modulate + MHA + gate * residual (temporal path)."""
    C = x_ref.shape[-1]
    xf = x_ref[0].astype(jnp.float32)
    xn = _layernorm_f32(xf)
    shift, scl, gate = _row_modulation(sel_ref, mod_ref, C)
    x_m = (xn * (1.0 + scl) + shift).astype(wqkv.dtype)
    a = _self_attn(x_m, wqkv, bqkv, wo, bo, heads=heads, scale=scale)
    o_ref[0] = (xf + gate * a).astype(o_ref.dtype)


def _cross_mlp_kernel(x_ref, y_ref, sel_ref, mlpmod_ref,
                      c_wq, c_bq, c_wkv, c_bkv, c_wo, c_bo,
                      w1, b1, w2, b2, o_ref, *, heads, scale):
    """Fused: cross-attn(y)+residual, then LN2 + t2i_modulate + MLP + gate*residual."""
    C = x_ref.shape[-1]
    xf = x_ref[0].astype(jnp.float32)
    ca = _cross_attn(x_ref[0].astype(c_wq.dtype), y_ref[0, 0].astype(c_wq.dtype),
                     c_wq, c_bq, c_wkv, c_bkv, c_wo, c_bo,
                     heads=heads, scale=scale)
    x2 = xf + ca
    xn2 = _layernorm_f32(x2)
    shift, scl, gate = _row_modulation(sel_ref, mlpmod_ref, C)
    x_m = (xn2 * (1.0 + scl) + shift).astype(w1.dtype)
    yv = _mlp_branch(x_m, w1, b1, w2, b2)
    o_ref[0] = (x2 + gate * yv).astype(o_ref.dtype)


def _full_block_kernel(x_ref, y_ref, sel_ref, msamod_ref, mlpmod_ref,
                       a_wqkv, a_bqkv, a_wo, a_bo,
                       c_wq, c_bq, c_wkv, c_bkv, c_wo, c_bo,
                       w1, b1, w2, b2, o_ref, *, heads, scale):
    """Whole block fused for the spatial path: x tile read once, written once."""
    C = x_ref.shape[-1]
    # ---- self attention branch ----
    xf = x_ref[0].astype(jnp.float32)
    xn = _layernorm_f32(xf)
    shift, scl, gate = _row_modulation(sel_ref, msamod_ref, C)
    x_m = (xn * (1.0 + scl) + shift).astype(a_wqkv.dtype)
    a = _self_attn(x_m, a_wqkv, a_bqkv, a_wo, a_bo, heads=heads, scale=scale)
    x1 = xf + gate * a
    # ---- cross attention branch ----
    ca = _cross_attn(x1.astype(c_wq.dtype), y_ref[0, 0].astype(c_wq.dtype),
                     c_wq, c_bq, c_wkv, c_bkv, c_wo, c_bo,
                     heads=heads, scale=scale)
    x2 = x1 + ca
    # ---- MLP branch ----
    xn2 = _layernorm_f32(x2)
    shift2, scl2, gate2 = _row_modulation(sel_ref, mlpmod_ref, C)
    x_m2 = (xn2 * (1.0 + scl2) + shift2).astype(w1.dtype)
    yv = _mlp_branch(x_m2, w1, b1, w2, b2)
    o_ref[0] = (x2 + gate2 * yv).astype(o_ref.dtype)


# --------------------------------------------------------------------------
# pallas_call wrappers
# --------------------------------------------------------------------------

def _const_spec(a):
    # Constant index_map -> Pallas fetches the block once and keeps it resident.
    return pl.BlockSpec(a.shape, lambda b, g, _n=a.ndim: (0,) * _n)


def _pack_qkv(p):
    wqkv = jnp.concatenate([p["wq"], p["wk"], p["wv"]], axis=1)       # (C, 3C)
    bqkv = jnp.concatenate([p["bq"], p["bk"], p["bv"]]).reshape(1, -1)
    return wqkv, bqkv, p["wo"], p["bo"].reshape(1, -1)


def _pack_q_kv(p):
    wkv = jnp.concatenate([p["wk"], p["wv"]], axis=1)                  # (C, 2C)
    bkv = jnp.concatenate([p["bk"], p["bv"]]).reshape(1, -1)
    return (p["wq"], p["bq"].reshape(1, -1), wkv, bkv,
            p["wo"], p["bo"].reshape(1, -1))


def fused_self_attention(x3, sel, mod, attn_p, *, heads):
    """x3: (B, G*rows, C) row-blocked per grid step; sel: (G, rows, T) one-hot
    frame selector; mod: (B, T, 3C) per-frame [shift|scale|gate]_msa."""
    B, NN, C = x3.shape
    G, rows, T = sel.shape
    assert G * rows == NN and C % heads == 0
    scale = 1.0 / float(np.sqrt(C // heads))
    wqkv, bqkv, wo, bo = _pack_qkv(attn_p)
    kernel = functools.partial(_self_attn_kernel, heads=heads, scale=scale)
    return pl.pallas_call(
        kernel,
        out_shape=jax.ShapeDtypeStruct(x3.shape, x3.dtype),
        grid=(B, G),
        in_specs=[
            pl.BlockSpec((1, rows, C), lambda b, g: (b, g, 0)),
            pl.BlockSpec((1, rows, T), lambda b, g: (g, 0, 0)),
            pl.BlockSpec((1, T, 3 * C), lambda b, g: (b, 0, 0)),
            _const_spec(wqkv), _const_spec(bqkv),
            _const_spec(wo), _const_spec(bo),
        ],
        out_specs=pl.BlockSpec((1, rows, C), lambda b, g: (b, g, 0)),
        compiler_params=_compiler_params(),
    )(x3, sel, mod, wqkv, bqkv, wo, bo)


def fused_cross_mlp(x3, y4, sel, mlp_mod, cross_p, mlp_p, *, heads):
    """x3: (B, T*S, C) frame-major; y4: (B, T, Sy, C); sel: (T, S, T)."""
    B, N, C = x3.shape
    _, T, Sy, _ = y4.shape
    S = N // T
    scale = 1.0 / float(np.sqrt(C // heads))
    c_wq, c_bq, c_wkv, c_bkv, c_wo, c_bo = _pack_q_kv(cross_p)
    w1, b1 = mlp_p["w1"], mlp_p["b1"].reshape(1, -1)
    w2, b2 = mlp_p["w2"], mlp_p["b2"].reshape(1, -1)
    kernel = functools.partial(_cross_mlp_kernel, heads=heads, scale=scale)
    return pl.pallas_call(
        kernel,
        out_shape=jax.ShapeDtypeStruct(x3.shape, x3.dtype),
        grid=(B, T),
        in_specs=[
            pl.BlockSpec((1, S, C), lambda b, t: (b, t, 0)),
            pl.BlockSpec((1, 1, Sy, C), lambda b, t: (b, t, 0, 0)),
            pl.BlockSpec((1, S, T), lambda b, t: (t, 0, 0)),
            pl.BlockSpec((1, T, 3 * C), lambda b, t: (b, 0, 0)),
            _const_spec(c_wq), _const_spec(c_bq),
            _const_spec(c_wkv), _const_spec(c_bkv),
            _const_spec(c_wo), _const_spec(c_bo),
            _const_spec(w1), _const_spec(b1),
            _const_spec(w2), _const_spec(b2),
        ],
        out_specs=pl.BlockSpec((1, S, C), lambda b, t: (b, t, 0)),
        compiler_params=_compiler_params(),
    )(x3, y4, sel, mlp_mod, c_wq, c_bq, c_wkv, c_bkv, c_wo, c_bo, w1, b1, w2, b2)


def fused_block(x3, y4, sel, msa_mod, mlp_mod, attn_p, cross_p, mlp_p, *, heads):
    """Whole spatial block (self-attn + cross-attn + MLP) in one kernel."""
    B, N, C = x3.shape
    _, T, Sy, _ = y4.shape
    S = N // T
    scale = 1.0 / float(np.sqrt(C // heads))
    a_wqkv, a_bqkv, a_wo, a_bo = _pack_qkv(attn_p)
    c_wq, c_bq, c_wkv, c_bkv, c_wo, c_bo = _pack_q_kv(cross_p)
    w1, b1 = mlp_p["w1"], mlp_p["b1"].reshape(1, -1)
    w2, b2 = mlp_p["w2"], mlp_p["b2"].reshape(1, -1)
    kernel = functools.partial(_full_block_kernel, heads=heads, scale=scale)
    return pl.pallas_call(
        kernel,
        out_shape=jax.ShapeDtypeStruct(x3.shape, x3.dtype),
        grid=(B, T),
        in_specs=[
            pl.BlockSpec((1, S, C), lambda b, t: (b, t, 0)),
            pl.BlockSpec((1, 1, Sy, C), lambda b, t: (b, t, 0, 0)),
            pl.BlockSpec((1, S, T), lambda b, t: (t, 0, 0)),
            pl.BlockSpec((1, T, 3 * C), lambda b, t: (b, 0, 0)),
            pl.BlockSpec((1, T, 3 * C), lambda b, t: (b, 0, 0)),
            _const_spec(a_wqkv), _const_spec(a_bqkv),
            _const_spec(a_wo), _const_spec(a_bo),
            _const_spec(c_wq), _const_spec(c_bq),
            _const_spec(c_wkv), _const_spec(c_bkv),
            _const_spec(c_wo), _const_spec(c_bo),
            _const_spec(w1), _const_spec(b1),
            _const_spec(w2), _const_spec(b2),
        ],
        out_specs=pl.BlockSpec((1, S, C), lambda b, t: (b, t, 0)),
        compiler_params=_compiler_params(),
    )(x3, y4, sel, msa_mod, mlp_mod, a_wqkv, a_bqkv, a_wo, a_bo,
      c_wq, c_bq, c_wkv, c_bkv, c_wo, c_bo, w1, b1, w2, b2)


# --------------------------------------------------------------------------
# STDiT3Block forward (thin glue around the fused kernels)
# --------------------------------------------------------------------------

def stdit3_block_forward(params, x, y, t, *, num_heads, temporal=False):
    B, N, C = x.shape
    _, V, T = y.shape[:3]
    assert V == 1, "cross-attn batch reshape requires V == 1 (as in PyTorch)"
    S = N // T
    Sy = y.shape[3]

    # Per-frame adaLN table; the (B, N, C)-sized tiled copies are never built.
    mod = (params["scale_shift_table"][None, None]
           + t.reshape(B, T, 6, C)).astype(jnp.float32)          # (B, T, 6, C)
    msa_mod = mod[:, :, 0:3].reshape(B, T, 3 * C)                 # [shift|scale|gate]_msa
    mlp_mod = mod[:, :, 3:6].reshape(B, T, 3 * C)                 # [shift|scale|gate]_mlp

    # One-hot selectors reproducing torch's `.repeat(1, N//T, 1, 1)` (tile)
    # broadcast exactly: x row n uses modulation frame (n % T).
    frame_sp = (jnp.arange(T)[:, None] * S + jnp.arange(S)[None, :]) % T   # (T, S)
    sel_sp = jax.nn.one_hot(frame_sp, T, dtype=jnp.float32)                # (T, S, T)

    y4 = y.reshape(B, T, Sy, C)

    if temporal:
        # self-attn over T per spatial site, then fused cross-attn + MLP.
        frame_tp = (jnp.arange(S)[:, None] + jnp.arange(T)[None, :] * S) % T  # (S, T)
        sel_tp = jax.nn.one_hot(frame_tp, T, dtype=jnp.float32)               # (S, T, T)
        xt = x.reshape(B, T, S, C).transpose(0, 2, 1, 3).reshape(B, S * T, C)
        xt = fused_self_attention(xt, sel_tp, msa_mod, params["attn"],
                                  heads=num_heads)
        x = xt.reshape(B, S, T, C).transpose(0, 2, 1, 3).reshape(B, N, C)
        x = fused_cross_mlp(x, y4, sel_sp, mlp_mod, params["cross_attn"],
                            params["mlp"], heads=num_heads)
    else:
        # everything per (batch, frame) tile -> one fused kernel for the block.
        x = fused_block(x, y4, sel_sp, msa_mod, mlp_mod, params["attn"],
                        params["cross_attn"], params["mlp"], heads=num_heads)
    return x


# --------------------------------------------------------------------------
# Pure-JAX reference (matches the PyTorch module, incl. .repeat == tile)
# --------------------------------------------------------------------------

def _ref_ln(x, eps=1e-6):
    mean = jnp.mean(x, axis=-1, keepdims=True)
    var = jnp.mean((x - mean) ** 2, axis=-1, keepdims=True)
    return (x - mean) / jnp.sqrt(var + eps)


def _ref_attn(q_in, kv_in, p, heads):
    Bq, Sq, C = q_in.shape
    Sk = kv_in.shape[1]
    dh = C // heads
    q = (q_in @ p["wq"] + p["bq"]).reshape(Bq, Sq, heads, dh).transpose(0, 2, 1, 3)
    k = (kv_in @ p["wk"] + p["bk"]).reshape(Bq, Sk, heads, dh).transpose(0, 2, 1, 3)
    v = (kv_in @ p["wv"] + p["bv"]).reshape(Bq, Sk, heads, dh).transpose(0, 2, 1, 3)
    s = jnp.einsum("bhqd,bhkd->bhqk", q, k) * (1.0 / float(np.sqrt(dh)))
    a = jax.nn.softmax(s, axis=-1)
    o = jnp.einsum("bhqk,bhkd->bhqd", a, v).transpose(0, 2, 1, 3).reshape(Bq, Sq, C)
    return o @ p["wo"] + p["bo"]


def reference_forward(params, x, y, t, *, num_heads, temporal=False):
    B, N, C = x.shape
    _, V, T = y.shape[:3]
    S = N // T
    Sy = y.shape[3]
    base = params["scale_shift_table"][None, None] + t.reshape(B, -1, 6, C)
    full = jnp.tile(base, (1, N // T, 1, 1))          # torch .repeat == tile
    shift_msa, scale_msa, gate_msa, shift_mlp, scale_mlp, gate_mlp = (
        full[:, :, j, :] for j in range(6))

    x_m = _ref_ln(x) * (1.0 + scale_msa) + shift_msa
    if temporal:
        x_m = x_m.reshape(B, T, S, C).transpose(0, 2, 1, 3).reshape(B * S, T, C)
        x_m = _ref_attn(x_m, x_m, params["attn"], num_heads)
        x_m = x_m.reshape(B, S, T, C).transpose(0, 2, 1, 3).reshape(B, N, C)
    else:
        x_m = x_m.reshape(B * T, S, C)
        x_m = _ref_attn(x_m, x_m, params["attn"], num_heads)
        x_m = x_m.reshape(B, N, C)
    x = x + gate_msa * x_m

    y_r = y.reshape(B * V * T, Sy, C)
    x_r = x.reshape(B * T, S, C)
    x_r = x_r + _ref_attn(x_r, y_r, params["cross_attn"], num_heads)
    x = x_r.reshape(B, N, C)

    x_m = _ref_ln(x) * (1.0 + scale_mlp) + shift_mlp
    h = jax.nn.gelu(x_m @ params["mlp"]["w1"] + params["mlp"]["b1"], approximate=True)
    x_m = h @ params["mlp"]["w2"] + params["mlp"]["b2"]
    x = x + gate_mlp * x_m
    return x


# --------------------------------------------------------------------------
# Deterministic synthetic parameters
# --------------------------------------------------------------------------

def init_params(key, C, mlp_ratio=4.0):
    Hd = int(C * mlp_ratio)
    keys = jax.random.split(key, 5)

    def lin(k, fan_in, fan_out):
        kw, kb = jax.random.split(k)
        w = jax.random.normal(kw, (fan_in, fan_out), jnp.float32) * 0.02
        b = jax.random.normal(kb, (fan_out,), jnp.float32) * 0.02
        return w, b

    def attn_params(k):
        ks = jax.random.split(k, 4)
        wq, bq = lin(ks[0], C, C)
        wk, bk = lin(ks[1], C, C)
        wv, bv = lin(ks[2], C, C)
        wo, bo = lin(ks[3], C, C)
        return dict(wq=wq, bq=bq, wk=wk, bk=bk, wv=wv, bv=bv, wo=wo, bo=bo)

    w1, b1 = lin(keys[0], C, Hd)
    w2, b2 = lin(keys[1], Hd, C)
    return dict(
        scale_shift_table=jax.random.normal(keys[2], (6, C), jnp.float32)
        / float(np.sqrt(C)),
        attn=attn_params(keys[3]),
        cross_attn=attn_params(keys[4]),
        mlp=dict(w1=w1, b1=b1, w2=w2, b2=b2),
    )


# --------------------------------------------------------------------------
# Main
# --------------------------------------------------------------------------

if __name__ == "__main__":
    B, T, S, C, HEADS, V, SY = 2, 8, 8, 32, 4, 1, 8
    N = T * S

    key = jax.random.PRNGKey(0)
    kx, ky, kt, kp = jax.random.split(key, 4)
    x = jax.random.normal(kx, (B, N, C), jnp.float32)
    y = jax.random.normal(ky, (B, V, T, SY, C), jnp.float32)
    t_emb = jax.random.normal(kt, (B, T, 6 * C), jnp.float32)
    params = init_params(kp, C)

    for temporal in (False, True):
        out = jax.block_until_ready(
            stdit3_block_forward(params, x, y, t_emb, num_heads=HEADS,
                                 temporal=temporal))
        ref = jax.block_until_ready(
            reference_forward(params, x, y, t_emb, num_heads=HEADS,
                              temporal=temporal))
        if not np.allclose(np.asarray(out), np.asarray(ref), rtol=1e-2, atol=1e-2):
            raise SystemExit(
                f"Pallas output does not match reference (temporal={temporal})")

    print("KERNEL_OK")
</pallas_src>

<mosaic_0001>
module attributes {stable_mosaic.version = 11 : i64} {
  func.func @_full_block_kernel(%arg0: i32, %arg1: i32, %arg2: memref<1x8x32xf32, #tpu.memory_space<vmem>>, %arg3: memref<1x1x8x32xf32, #tpu.memory_space<vmem>>, %arg4: memref<1x8x8xf32, #tpu.memory_space<vmem>>, %arg5: memref<1x8x96xf32, #tpu.memory_space<vmem>>, %arg6: memref<1x8x96xf32, #tpu.memory_space<vmem>>, %arg7: memref<32x96xf32, #tpu.memory_space<vmem>>, %arg8: memref<1x96xf32, #tpu.memory_space<vmem>>, %arg9: memref<32x32xf32, #tpu.memory_space<vmem>>, %arg10: memref<1x32xf32, #tpu.memory_space<vmem>>, %arg11: memref<32x32xf32, #tpu.memory_space<vmem>>, %arg12: memref<1x32xf32, #tpu.memory_space<vmem>>, %arg13: memref<32x64xf32, #tpu.memory_space<vmem>>, %arg14: memref<1x64xf32, #tpu.memory_space<vmem>>, %arg15: memref<32x32xf32, #tpu.memory_space<vmem>>, %arg16: memref<1x32xf32, #tpu.memory_space<vmem>>, %arg17: memref<32x128xf32, #tpu.memory_space<vmem>>, %arg18: memref<1x128xf32, #tpu.memory_space<vmem>>, %arg19: memref<128x32xf32, #tpu.memory_space<vmem>>, %arg20: memref<1x32xf32, #tpu.memory_space<vmem>>, %arg21: memref<1x8x32xf32, #tpu.memory_space<vmem>>) attributes {dimension_semantics = [#tpu.dimension_semantics<parallel>, #tpu.dimension_semantics<parallel>], iteration_bounds = array<i64: 2, 8>, scalar_prefetch = 0 : i64, scratch_operands = 0 : i64, tpu.core_type = #tpu.core_type<tc>, window_params = [{transform_indices = @transform_0, window_bounds = array<i64: 1, 8, 32>}, {transform_indices = @transform_1, window_bounds = array<i64: 1, 1, 8, 32>}, {transform_indices = @transform_2, window_bounds = array<i64: 1, 8, 8>}, {transform_indices = @transform_3, window_bounds = array<i64: 1, 8, 96>}, {transform_indices = @transform_4, window_bounds = array<i64: 1, 8, 96>}, {pipeline_mode = #tpu.pipeline_mode<synchronous>, transform_indices = @transform_5, window_bounds = array<i64: 32, 96>}, {pipeline_mode = #tpu.pipeline_mode<synchronous>, transform_indices = @transform_6, window_bounds = array<i64: 1, 96>}, {pipeline_mode = #tpu.pipeline_mode<synchronous>, transform_indices = @transform_7, window_bounds = array<i64: 32, 32>}, {pipeline_mode = #tpu.pipeline_mode<synchronous>, transform_indices = @transform_8, window_bounds = array<i64: 1, 32>}, {pipeline_mode = #tpu.pipeline_mode<synchronous>, transform_indices = @transform_9, window_bounds = array<i64: 32, 32>}, {pipeline_mode = #tpu.pipeline_mode<synchronous>, transform_indices = @transform_10, window_bounds = array<i64: 1, 32>}, {pipeline_mode = #tpu.pipeline_mode<synchronous>, transform_indices = @transform_11, window_bounds = array<i64: 32, 64>}, {pipeline_mode = #tpu.pipeline_mode<synchronous>, transform_indices = @transform_12, window_bounds = array<i64: 1, 64>}, {pipeline_mode = #tpu.pipeline_mode<synchronous>, transform_indices = @transform_13, window_bounds = array<i64: 32, 32>}, {pipeline_mode = #tpu.pipeline_mode<synchronous>, transform_indices = @transform_14, window_bounds = array<i64: 1, 32>}, {pipeline_mode = #tpu.pipeline_mode<synchronous>, transform_indices = @transform_15, window_bounds = array<i64: 32, 128>}, {pipeline_mode = #tpu.pipeline_mode<synchronous>, transform_indices = @transform_16, window_bounds = array<i64: 1, 128>}, {pipeline_mode = #tpu.pipeline_mode<synchronous>, transform_indices = @transform_17, window_bounds = array<i64: 128, 32>}, {pipeline_mode = #tpu.pipeline_mode<synchronous>, transform_indices = @transform_18, window_bounds = array<i64: 1, 32>}, {transform_indices = @transform_19, window_bounds = array<i64: 1, 8, 32>}]} {
    %c0 = arith.constant 0 : index
    %c0_0 = arith.constant 0 : index
    %c0_1 = arith.constant 0 : index
    %0 = vector.load %arg2[%c0, %c0_0, %c0_1] : memref<1x8x32xf32, #tpu.memory_space<vmem>>, vector<1x8x32xf32>
    %1 = vector.shape_cast %0 : vector<1x8x32xf32> to vector<8x32xf32>
    %cst = arith.constant dense<0.000000e+00> : vector<8xf32>
    %2 = vector.multi_reduction <add>, %1, %cst [1] : vector<8x32xf32> to vector<8xf32>
    %3 = vector.shape_cast %2 : vector<8xf32> to vector<8x1xf32>
    %cst_2 = arith.constant 3.200000e+01 : f32
    %4 = vector.broadcast %cst_2 : f32 to vector<8x1xf32>
    %5 = arith.divf %3, %4 : vector<8x1xf32>
    %6 = vector.broadcast %5 : vector<8x1xf32> to vector<8x32xf32>
    %7 = arith.subf %1, %6 : vector<8x32xf32>
    %8 = arith.mulf %7, %7 : vector<8x32xf32>
    %cst_3 = arith.constant dense<0.000000e+00> : vector<8xf32>
    %9 = vector.multi_reduction <add>, %8, %cst_3 [1] : vector<8x32xf32> to vector<8xf32>
    %10 = vector.shape_cast %9 : vector<8xf32> to vector<8x1xf32>
    %cst_4 = arith.constant 3.200000e+01 : f32
    %11 = vector.broadcast %cst_4 : f32 to vector<8x1xf32>
    %12 = arith.divf %10, %11 : vector<8x1xf32>
    %cst_5 = arith.constant 9.99999997E-7 : f32
    %13 = vector.broadcast %cst_5 : f32 to vector<8x1xf32>
    %14 = arith.addf %12, %13 : vector<8x1xf32>
    %15 = math.rsqrt %14 : vector<8x1xf32>
    %16 = vector.broadcast %15 : vector<8x1xf32> to vector<8x32xf32>
    %17 = arith.mulf %7, %16 : vector<8x32xf32>
    %c0_6 = arith.constant 0 : index
    %c0_7 = arith.constant 0 : index
    %c0_8 = arith.constant 0 : index
    %18 = vector.load %arg4[%c0_6, %c0_7, %c0_8] : memref<1x8x8xf32, #tpu.memory_space<vmem>>, vector<1x8x8xf32>
    %19 = vector.shape_cast %18 : vector<1x8x8xf32> to vector<8x8xf32>
    %c0_9 = arith.constant 0 : index
    %c0_10 = arith.constant 0 : index
    %c0_11 = arith.constant 0 : index
    %20 = vector.load %arg5[%c0_9, %c0_10, %c0_11] : memref<1x8x96xf32, #tpu.memory_space<vmem>>, vector<1x8x96xf32>
    %21 = vector.shape_cast %20 : vector<1x8x96xf32> to vector<8x96xf32>
    %cst_12 = arith.constant dense<0.000000e+00> : vector<8x96xf32>
    %22 = tpu.matmul %19, %21, %cst_12 {dimension_numbers = #tpu.dot_dimension_numbers<[1], [0], [0], [1], [0, 0, 1, 1], [], []>} : vector<8x8xf32>, vector<8x96xf32>, vector<8x96xf32> -> vector<8x96xf32>
    %23 = vector.extract_strided_slice %22 {offsets = [0, 0], sizes = [8, 32], strides = [1, 1]} : vector<8x96xf32> to vector<8x32xf32>
    %24 = vector.extract_strided_slice %22 {offsets = [0, 32], sizes = [8, 32], strides = [1, 1]} : vector<8x96xf32> to vector<8x32xf32>
    %25 = vector.extract_strided_slice %22 {offsets = [0, 64], sizes = [8, 32], strides = [1, 1]} : vector<8x96xf32> to vector<8x32xf32>
    %cst_13 = arith.constant 1.000000e+00 : f32
    %26 = vector.broadcast %cst_13 : f32 to vector<8x32xf32>
    %27 = arith.addf %26, %24 : vector<8x32xf32>
    %28 = arith.mulf %17, %27 : vector<8x32xf32>
    %29 = arith.addf %28, %23 : vector<8x32xf32>
    %c0_14 = arith.constant 0 : index
    %c0_15 = arith.constant 0 : index
    %30 = vector.load %arg7[%c0_14, %c0_15] : memref<32x96xf32, #tpu.memory_space<vmem>>, vector<32x96xf32>
    %cst_16 = arith.constant dense<0.000000e+00> : vector<8x96xf32>
    %31 = tpu.matmul %29, %30, %cst_16 {dimension_numbers = #tpu.dot_dimension_numbers<[1], [0], [0], [1], [0, 0, 1, 1], [], []>} : vector<8x32xf32>, vector<32x96xf32>, vector<8x96xf32> -> vector<8x96xf32>
    %c0_17 = arith.constant 0 : index
    %c0_18 = arith.constant 0 : index
    %32 = vector.load %arg8[%c0_17, %c0_18] : memref<1x96xf32, #tpu.memory_space<vmem>>, vector<1x96xf32>
    %33 = vector.broadcast %32 : vector<1x96xf32> to vector<8x96xf32>
    %34 = arith.addf %31, %33 : vector<8x96xf32>
    %35 = vector.extract_strided_slice %34 {offsets = [0, 0], sizes = [8, 32], strides = [1, 1]} : vector<8x96xf32> to vector<8x32xf32>
    %36 = vector.extract_strided_slice %34 {offsets = [0, 32], sizes = [8, 32], strides = [1, 1]} : vector<8x96xf32> to vector<8x32xf32>
    %37 = vector.extract_strided_slice %34 {offsets = [0, 64], sizes = [8, 32], strides = [1, 1]} : vector<8x96xf32> to vector<8x32xf32>
    %38 = vector.extract_strided_slice %35 {offsets = [0, 0], sizes = [8, 8], strides = [1, 1]} : vector<8x32xf32> to vector<8x8xf32>
    %39 = vector.shape_cast %38 : vector<8x8xf32> to vector<1x8x8xf32>
    %40 = vector.extract_strided_slice %35 {offsets = [0, 8], sizes = [8, 8], strides = [1, 1]} : vector<8x32xf32> to vector<8x8xf32>
    %41 = vector.shape_cast %40 : vector<8x8xf32> to vector<1x8x8xf32>
    %42 = vector.extract_strided_slice %35 {offsets = [0, 16], sizes = [8, 8], strides = [1, 1]} : vector<8x32xf32> to vector<8x8xf32>
    %43 = vector.shape_cast %42 : vector<8x8xf32> to vector<1x8x8xf32>
    %44 = vector.extract_strided_slice %35 {offsets = [0, 24], sizes = [8, 8], strides = [1, 1]} : vector<8x32xf32> to vector<8x8xf32>
    %45 = vector.shape_cast %44 : vector<8x8xf32> to vector<1x8x8xf32>
    %46 = tpu.concatenate %39, %41, %43, %45 in 0 : vector<1x8x8xf32>, vector<1x8x8xf32>, vector<1x8x8xf32>, vector<1x8x8xf32> -> vector<4x8x8xf32>
    %47 = vector.extract_strided_slice %36 {offsets = [0, 0], sizes = [8, 8], strides = [1, 1]} : vector<8x32xf32> to vector<8x8xf32>
    %48 = vector.shape_cast %47 : vector<8x8xf32> to vector<1x8x8xf32>
    %49 = vector.extract_strided_slice %36 {offsets = [0, 8], sizes = [8, 8], strides = [1, 1]} : vector<8x32xf32> to vector<8x8xf32>
    %50 = vector.shape_cast %49 : vector<8x8xf32> to vector<1x8x8xf32>
    %51 = vector.extract_strided_slice %36 {offsets = [0, 16], sizes = [8, 8], strides = [1, 1]} : vector<8x32xf32> to vector<8x8xf32>
    %52 = vector.shape_cast %51 : vector<8x8xf32> to vector<1x8x8xf32>
    %53 = vector.extract_strided_slice %36 {offsets = [0, 24], sizes = [8, 8], strides = [1, 1]} : vector<8x32xf32> to vector<8x8xf32>
    %54 = vector.shape_cast %53 : vector<8x8xf32> to vector<1x8x8xf32>
    %55 = tpu.concatenate %48, %50, %52, %54 in 0 : vector<1x8x8xf32>, vector<1x8x8xf32>, vector<1x8x8xf32>, vector<1x8x8xf32> -> vector<4x8x8xf32>
    %56 = vector.extract_strided_slice %37 {offsets = [0, 0], sizes = [8, 8], strides = [1, 1]} : vector<8x32xf32> to vector<8x8xf32>
    %57 = vector.shape_cast %56 : vector<8x8xf32> to vector<1x8x8xf32>
    %58 = vector.extract_strided_slice %37 {offsets = [0, 8], sizes = [8, 8], strides = [1, 1]} : vector<8x32xf32> to vector<8x8xf32>
    %59 = vector.shape_cast %58 : vector<8x8xf32> to vector<1x8x8xf32>
    %60 = vector.extract_strided_slice %37 {offsets = [0, 16], sizes = [8, 8], strides = [1, 1]} : vector<8x32xf32> to vector<8x8xf32>
    %61 = vector.shape_cast %60 : vector<8x8xf32> to vector<1x8x8xf32>
    %62 = vector.extract_strided_slice %37 {offsets = [0, 24], sizes = [8, 8], strides = [1, 1]} : vector<8x32xf32> to vector<8x8xf32>
    %63 = vector.shape_cast %62 : vector<8x8xf32> to vector<1x8x8xf32>
    %64 = tpu.concatenate %57, %59, %61, %63 in 0 : vector<1x8x8xf32>, vector<1x8x8xf32>, vector<1x8x8xf32>, vector<1x8x8xf32> -> vector<4x8x8xf32>
    "tpu.trace_start"() <{level = 10 : i32, message = "hqd,hkd->hqk"}> : () -> ()
    %cst_19 = arith.constant dense<0.000000e+00> : vector<4x8x8xf32>
    %65 = tpu.matmul %46, %55, %cst_19 {dimension_numbers = #tpu.dot_dimension_numbers<[2], [2], [1], [1], [0, 0, 0, 1, 1, 1], [0], [0]>} : vector<4x8x8xf32>, vector<4x8x8xf32>, vector<4x8x8xf32> -> vector<4x8x8xf32>
    "tpu.trace_stop"() : () -> ()
    %cst_20 = arith.constant 0.353553385 : f32
    %66 = vector.broadcast %cst_20 : f32 to vector<4x8x8xf32>
    %67 = arith.mulf %65, %66 : vector<4x8x8xf32>
    %cst_21 = arith.constant dense<0xFF800000> : vector<4x8xf32>
    %68 = vector.multi_reduction <maximumf>, %67, %cst_21 [2] : vector<4x8x8xf32> to vector<4x8xf32>
    %69 = vector.shape_cast %68 : vector<4x8xf32> to vector<4x8x1xf32>
    %70 = vector.broadcast %69 : vector<4x8x1xf32> to vector<4x8x8xf32>
    %71 = arith.subf %67, %70 : vector<4x8x8xf32>
    %72 = math.exp %71 : vector<4x8x8xf32>
    %cst_22 = arith.constant dense<0.000000e+00> : vector<4x8xf32>
    %73 = vector.multi_reduction <add>, %72, %cst_22 [2] : vector<4x8x8xf32> to vector<4x8xf32>
    %74 = vector.shape_cast %73 : vector<4x8xf32> to vector<4x8x1xf32>
    %75 = tpu.reciprocal %74 {approx = true} : vector<4x8x1xf32> -> vector<4x8x1xf32>
    %76 = vector.broadcast %75 : vector<4x8x1xf32> to vector<4x8x8xf32>
    %77 = arith.mulf %72, %76 : vector<4x8x8xf32>
    "tpu.trace_start"() <{level = 10 : i32, message = "hqk,hkd->hqd"}> : () -> ()
    %cst_23 = arith.constant dense<0.000000e+00> : vector<4x8x8xf32>
    %78 = tpu.matmul %77, %64, %cst_23 {dimension_numbers = #tpu.dot_dimension_numbers<[2], [1], [1], [2], [0, 0, 0, 1, 1, 2], [0], [0]>} : vector<4x8x8xf32>, vector<4x8x8xf32>, vector<4x8x8xf32> -> vector<4x8x8xf32>
    "tpu.trace_stop"() : () -> ()
    %79 = vector.extract_strided_slice %78 {offsets = [0, 0, 0], sizes = [1, 8, 8], strides = [1, 1, 1]} : vector<4x8x8xf32> to vector<1x8x8xf32>
    %80 = vector.shape_cast %79 : vector<1x8x8xf32> to vector<8x8xf32>
    %81 = vector.extract_strided_slice %78 {offsets = [1, 0, 0], sizes = [1, 8, 8], strides = [1, 1, 1]} : vector<4x8x8xf32> to vector<1x8x8xf32>
    %82 = vector.shape_cast %81 : vector<1x8x8xf32> to vector<8x8xf32>
    %83 = vector.extract_strided_slice %78 {offsets = [2, 0, 0], sizes = [1, 8, 8], strides = [1, 1, 1]} : vector<4x8x8xf32> to vector<1x8x8xf32>
    %84 = vector.shape_cast %83 : vector<1x8x8xf32> to vector<8x8xf32>
    %85 = vector.extract_strided_slice %78 {offsets = [3, 0, 0], sizes = [1, 8, 8], strides = [1, 1, 1]} : vector<4x8x8xf32> to vector<1x8x8xf32>
    %86 = vector.shape_cast %85 : vector<1x8x8xf32> to vector<8x8xf32>
    %87 = tpu.concatenate %80, %82, %84, %86 in 1 : vector<8x8xf32>, vector<8x8xf32>, vector<8x8xf32>, vector<8x8xf32> -> vector<8x32xf32>
    %c0_24 = arith.constant 0 : index
    %c0_25 = arith.constant 0 : index
    %88 = vector.load %arg9[%c0_24, %c0_25] : memref<32x32xf32, #tpu.memory_space<vmem>>, vector<32x32xf32>
    %cst_26 = arith.constant dense<0.000000e+00> : vector<8x32xf32>
    %89 = tpu.matmul %87, %88, %cst_26 {dimension_numbers = #tpu.dot_dimension_numbers<[1], [0], [0], [1], [0, 0, 1, 1], [], []>} : vector<8x32xf32>, vector<32x32xf32>, vector<8x32xf32> -> vector<8x32xf32>
    %c0_27 = arith.constant 0 : index
    %c0_28 = arith.constant 0 : index
    %90 = vector.load %arg10[%c0_27, %c0_28] : memref<1x32xf32, #tpu.memory_space<vmem>>, vector<1x32xf32>
    %91 = vector.broadcast %90 : vector<1x32xf32> to vector<8x32xf32>
    %92 = arith.addf %89, %91 : vector<8x32xf32>
    %93 = arith.mulf %25, %92 : vector<8x32xf32>
    %94 = arith.addf %1, %93 : vector<8x32xf32>
    %c0_29 = arith.constant 0 : index
    %c0_30 = arith.constant 0 : index
    %c0_31 = arith.constant 0 : index
    %c0_32 = arith.constant 0 : index
    %95 = vector.load %arg3[%c0_29, %c0_30, %c0_31, %c0_32] : memref<1x1x8x32xf32, #tpu.memory_space<vmem>>, vector<1x1x8x32xf32>
    %96 = vector.shape_cast %95 : vector<1x1x8x32xf32> to vector<8x32xf32>
    %c0_33 = arith.constant 0 : index
    %c0_34 = arith.constant 0 : index
    %97 = vector.load %arg11[%c0_33, %c0_34] : memref<32x32xf32, #tpu.memory_space<vmem>>, vector<32x32xf32>
    %cst_35 = arith.constant dense<0.000000e+00> : vector<8x32xf32>
    %98 = tpu.matmul %94, %97, %cst_35 {dimension_numbers = #tpu.dot_dimension_numbers<[1], [0], [0], [1], [0, 0, 1, 1], [], []>} : vector<8x32xf32>, vector<32x32xf32>, vector<8x32xf32> -> vector<8x32xf32>
    %c0_36 = arith.constant 0 : index
    %c0_37 = arith.constant 0 : index
    %99 = vector.load %arg12[%c0_36, %c0_37] : memref<1x32xf32, #tpu.memory_space<vmem>>, vector<1x32xf32>
    %100 = vector.broadcast %99 : vector<1x32xf32> to vector<8x32xf32>
    %101 = arith.addf %98, %100 : vector<8x32xf32>
    %c0_38 = arith.constant 0 : index
    %c0_39 = arith.constant 0 : index
    %102 = vector.load %arg13[%c0_38, %c0_39] : memref<32x64xf32, #tpu.memory_space<vmem>>, vector<32x64xf32>
    %cst_40 = arith.constant dense<0.000000e+00> : vector<8x64xf32>
    %103 = tpu.matmul %96, %102, %cst_40 {dimension_numbers = #tpu.dot_dimension_numbers<[1], [0], [0], [1], [0, 0, 1, 1], [], []>} : vector<8x32xf32>, vector<32x64xf32>, vector<8x64xf32> -> vector<8x64xf32>
    %c0_41 = arith.constant 0 : index
    %c0_42 = arith.constant 0 : index
    %104 = vector.load %arg14[%c0_41, %c0_42] : memref<1x64xf32, #tpu.memory_space<vmem>>, vector<1x64xf32>
    %105 = vector.broadcast %104 : vector<1x64xf32> to vector<8x64xf32>
    %106 = arith.addf %103, %105 : vector<8x64xf32>
    %107 = vector.extract_strided_slice %106 {offsets = [0, 0], sizes = [8, 32], strides = [1, 1]} : vector<8x64xf32> to vector<8x32xf32>
    %108 = vector.extract_strided_slice %106 {offsets = [0, 32], sizes = [8, 32], strides = [1, 1]} : vector<8x64xf32> to vector<8x32xf32>
    %109 = vector.extract_strided_slice %101 {offsets = [0, 0], sizes = [8, 8], strides = [1, 1]} : vector<8x32xf32> to vector<8x8xf32>
    %110 = vector.shape_cast %109 : vector<8x8xf32> to vector<1x8x8xf32>
    %111 = vector.extract_strided_slice %101 {offsets = [0, 8], sizes = [8, 8], strides = [1, 1]} : vector<8x32xf32> to vector<8x8xf32>
    %112 = vector.shape_cast %111 : vector<8x8xf32> to vector<1x8x8xf32>
    %113 = vector.extract_strided_slice %101 {offsets = [0, 16], sizes = [8, 8], strides = [1, 1]} : vector<8x32xf32> to vector<8x8xf32>
    %114 = vector.shape_cast %113 : vector<8x8xf32> to vector<1x8x8xf32>
    %115 = vector.extract_strided_slice %101 {offsets = [0, 24], sizes = [8, 8], strides = [1, 1]} : vector<8x32xf32> to vector<8x8xf32>
    %116 = vector.shape_cast %115 : vector<8x8xf32> to vector<1x8x8xf32>
    %117 = tpu.concatenate %110, %112, %114, %116 in 0 : vector<1x8x8xf32>, vector<1x8x8xf32>, vector<1x8x8xf32>, vector<1x8x8xf32> -> vector<4x8x8xf32>
    %118 = vector.extract_strided_slice %107 {offsets = [0, 0], sizes = [8, 8], strides = [1, 1]} : vector<8x32xf32> to vector<8x8xf32>
    %119 = vector.shape_cast %118 : vector<8x8xf32> to vector<1x8x8xf32>
    %120 = vector.extract_strided_slice %107 {offsets = [0, 8], sizes = [8, 8], strides = [1, 1]} : vector<8x32xf32> to vector<8x8xf32>
    %121 = vector.shape_cast %120 : vector<8x8xf32> to vector<1x8x8xf32>
    %122 = vector.extract_strided_slice %107 {offsets = [0, 16], sizes = [8, 8], strides = [1, 1]} : vector<8x32xf32> to vector<8x8xf32>
    %123 = vector.shape_cast %122 : vector<8x8xf32> to vector<1x8x8xf32>
    %124 = vector.extract_strided_slice %107 {offsets = [0, 24], sizes = [8, 8], strides = [1, 1]} : vector<8x32xf32> to vector<8x8xf32>
    %125 = vector.shape_cast %124 : vector<8x8xf32> to vector<1x8x8xf32>
    %126 = tpu.concatenate %119, %121, %123, %125 in 0 : vector<1x8x8xf32>, vector<1x8x8xf32>, vector<1x8x8xf32>, vector<1x8x8xf32> -> vector<4x8x8xf32>
    %127 = vector.extract_strided_slice %108 {offsets = [0, 0], sizes = [8, 8], strides = [1, 1]} : vector<8x32xf32> to vector<8x8xf32>
    %128 = vector.shape_cast %127 : vector<8x8xf32> to vector<1x8x8xf32>
    %129 = vector.extract_strided_slice %108 {offsets = [0, 8], sizes = [8, 8], strides = [1, 1]} : vector<8x32xf32> to vector<8x8xf32>
    %130 = vector.shape_cast %129 : vector<8x8xf32> to vector<1x8x8xf32>
    %131 = vector.extract_strided_slice %108 {offsets = [0, 16], sizes = [8, 8], strides = [1, 1]} : vector<8x32xf32> to vector<8x8xf32>
    %132 = vector.shape_cast %131 : vector<8x8xf32> to vector<1x8x8xf32>
    %133 = vector.extract_strided_slice %108 {offsets = [0, 24], sizes = [8, 8], strides = [1, 1]} : vector<8x32xf32> to vector<8x8xf32>
    %134 = vector.shape_cast %133 : vector<8x8xf32> to vector<1x8x8xf32>
    %135 = tpu.concatenate %128, %130, %132, %134 in 0 : vector<1x8x8xf32>, vector<1x8x8xf32>, vector<1x8x8xf32>, vector<1x8x8xf32> -> vector<4x8x8xf32>
    "tpu.trace_start"() <{level = 10 : i32, message = "hqd,hkd->hqk"}> : () -> ()
    %cst_43 = arith.constant dense<0.000000e+00> : vector<4x8x8xf32>
    %136 = tpu.matmul %117, %126, %cst_43 {dimension_numbers = #tpu.dot_dimension_numbers<[2], [2], [1], [1], [0, 0, 0, 1, 1, 1], [0], [0]>} : vector<4x8x8xf32>, vector<4x8x8xf32>, vector<4x8x8xf32> -> vector<4x8x8xf32>
    "tpu.trace_stop"() : () -> ()
    %cst_44 = arith.constant 0.353553385 : f32
    %137 = vector.broadcast %cst_44 : f32 to vector<4x8x8xf32>
    %138 = arith.mulf %136, %137 : vector<4x8x8xf32>
    %cst_45 = arith.constant dense<0xFF800000> : vector<4x8xf32>
    %139 = vector.multi_reduction <maximumf>, %138, %cst_45 [2] : vector<4x8x8xf32> to vector<4x8xf32>
    %140 = vector.shape_cast %139 : vector<4x8xf32> to vector<4x8x1xf32>
    %141 = vector.broadcast %140 : vector<4x8x1xf32> to vector<4x8x8xf32>
    %142 = arith.subf %138, %141 : vector<4x8x8xf32>
    %143 = math.exp %142 : vector<4x8x8xf32>
    %cst_46 = arith.constant dense<0.000000e+00> : vector<4x8xf32>
    %144 = vector.multi_reduction <add>, %143, %cst_46 [2] : vector<4x8x8xf32> to vector<4x8xf32>
    %145 = vector.shape_cast %144 : vector<4x8xf32> to vector<4x8x1xf32>
    %146 = tpu.reciprocal %145 {approx = true} : vector<4x8x1xf32> -> vector<4x8x1xf32>
    %147 = vector.broadcast %146 : vector<4x8x1xf32> to vector<4x8x8xf32>
    %148 = arith.mulf %143, %147 : vector<4x8x8xf32>
    "tpu.trace_start"() <{level = 10 : i32, message = "hqk,hkd->hqd"}> : () -> ()
    %cst_47 = arith.constant dense<0.000000e+00> : vector<4x8x8xf32>
    %149 = tpu.matmul %148, %135, %cst_47 {dimension_numbers = #tpu.dot_dimension_numbers<[2], [1], [1], [2], [0, 0, 0, 1, 1, 2], [0], [0]>} : vector<4x8x8xf32>, vector<4x8x8xf32>, vector<4x8x8xf32> -> vector<4x8x8xf32>
    "tpu.trace_stop"() : () -> ()
    %150 = vector.extract_strided_slice %149 {offsets = [0, 0, 0], sizes = [1, 8, 8], strides = [1, 1, 1]} : vector<4x8x8xf32> to vector<1x8x8xf32>
    %151 = vector.shape_cast %150 : vector<1x8x8xf32> to vector<8x8xf32>
    %152 = vector.extract_strided_slice %149 {offsets = [1, 0, 0], sizes = [1, 8, 8], strides = [1, 1, 1]} : vector<4x8x8xf32> to vector<1x8x8xf32>
    %153 = vector.shape_cast %152 : vector<1x8x8xf32> to vector<8x8xf32>
    %154 = vector.extract_strided_slice %149 {offsets = [2, 0, 0], sizes = [1, 8, 8], strides = [1, 1, 1]} : vector<4x8x8xf32> to vector<1x8x8xf32>
    %155 = vector.shape_cast %154 : vector<1x8x8xf32> to vector<8x8xf32>
    %156 = vector.extract_strided_slice %149 {offsets = [3, 0, 0], sizes = [1, 8, 8], strides = [1, 1, 1]} : vector<4x8x8xf32> to vector<1x8x8xf32>
    %157 = vector.shape_cast %156 : vector<1x8x8xf32> to vector<8x8xf32>
    %158 = tpu.concatenate %151, %153, %155, %157 in 1 : vector<8x8xf32>, vector<8x8xf32>, vector<8x8xf32>, vector<8x8xf32> -> vector<8x32xf32>
    %c0_48 = arith.constant 0 : index
    %c0_49 = arith.constant 0 : index
    %159 = vector.load %arg15[%c0_48, %c0_49] : memref<32x32xf32, #tpu.memory_space<vmem>>, vector<32x32xf32>
    %cst_50 = arith.constant dense<0.000000e+00> : vector<8x32xf32>
    %160 = tpu.matmul %158, %159, %cst_50 {dimension_numbers = #tpu.dot_dimension_numbers<[1], [0], [0], [1], [0, 0, 1, 1], [], []>} : vector<8x32xf32>, vector<32x32xf32>, vector<8x32xf32> -> vector<8x32xf32>
    %c0_51 = arith.constant 0 : index
    %c0_52 = arith.constant 0 : index
    %161 = vector.load %arg16[%c0_51, %c0_52] : memref<1x32xf32, #tpu.memory_space<vmem>>, vector<1x32xf32>
    %162 = vector.broadcast %161 : vector<1x32xf32> to vector<8x32xf32>
    %163 = arith.addf %160, %162 : vector<8x32xf32>
    %164 = arith.addf %94, %163 : vector<8x32xf32>
    %cst_53 = arith.constant dense<0.000000e+00> : vector<8xf32>
    %165 = vector.multi_reduction <add>, %164, %cst_53 [1] : vector<8x32xf32> to vector<8xf32>
    %166 = vector.shape_cast %165 : vector<8xf32> to vector<8x1xf32>
    %cst_54 = arith.constant 3.200000e+01 : f32
    %167 = vector.broadcast %cst_54 : f32 to vector<8x1xf32>
    %168 = arith.divf %166, %167 : vector<8x1xf32>
    %169 = vector.broadcast %168 : vector<8x1xf32> to vector<8x32xf32>
    %170 = arith.subf %164, %169 : vector<8x32xf32>
    %171 = arith.mulf %170, %170 : vector<8x32xf32>
    %cst_55 = arith.constant dense<0.000000e+00> : vector<8xf32>
    %172 = vector.multi_reduction <add>, %171, %cst_55 [1] : vector<8x32xf32> to vector<8xf32>
    %173 = vector.shape_cast %172 : vector<8xf32> to vector<8x1xf32>
    %cst_56 = arith.constant 3.200000e+01 : f32
    %174 = vector.broadcast %cst_56 : f32 to vector<8x1xf32>
    %175 = arith.divf %173, %174 : vector<8x1xf32>
    %cst_57 = arith.constant 9.99999997E-7 : f32
    %176 = vector.broadcast %cst_57 : f32 to vector<8x1xf32>
    %177 = arith.addf %175, %176 : vector<8x1xf32>
    %178 = math.rsqrt %177 : vector<8x1xf32>
    %179 = vector.broadcast %178 : vector<8x1xf32> to vector<8x32xf32>
    %180 = arith.mulf %170, %179 : vector<8x32xf32>
    %c0_58 = arith.constant 0 : index
    %c0_59 = arith.constant 0 : index
    %c0_60 = arith.constant 0 : index
    %181 = vector.load %arg4[%c0_58, %c0_59, %c0_60] : memref<1x8x8xf32, #tpu.memory_space<vmem>>, vector<1x8x8xf32>
    %182 = vector.shape_cast %181 : vector<1x8x8xf32> to vector<8x8xf32>
    %c0_61 = arith.constant 0 : index
    %c0_62 = arith.constant 0 : index
    %c0_63 = arith.constant 0 : index
    %183 = vector.load %arg6[%c0_61, %c0_62, %c0_63] : memref<1x8x96xf32, #tpu.memory_space<vmem>>, vector<1x8x96xf32>
    %184 = vector.shape_cast %183 : vector<1x8x96xf32> to vector<8x96xf32>
    %cst_64 = arith.constant dense<0.000000e+00> : vector<8x96xf32>
    %185 = tpu.matmul %182, %184, %cst_64 {dimension_numbers = #tpu.dot_dimension_numbers<[1], [0], [0], [1], [0, 0, 1, 1], [], []>} : vector<8x8xf32>, vector<8x96xf32>, vector<8x96xf32> -> vector<8x96xf32>
    %186 = vector.extract_strided_slice %185 {offsets = [0, 0], sizes = [8, 32], strides = [1, 1]} : vector<8x96xf32> to vector<8x32xf32>
    %187 = vector.extract_strided_slice %185 {offsets = [0, 32], sizes = [8, 32], strides = [1, 1]} : vector<8x96xf32> to vector<8x32xf32>
    %188 = vector.extract_strided_slice %185 {offsets = [0, 64], sizes = [8, 32], strides = [1, 1]} : vector<8x96xf32> to vector<8x32xf32>
    %cst_65 = arith.constant 1.000000e+00 : f32
    %189 = vector.broadcast %cst_65 : f32 to vector<8x32xf32>
    %190 = arith.addf %189, %187 : vector<8x32xf32>
    %191 = arith.mulf %180, %190 : vector<8x32xf32>
    %192 = arith.addf %191, %186 : vector<8x32xf32>
    %c0_66 = arith.constant 0 : index
    %c0_67 = arith.constant 0 : index
    %193 = vector.load %arg17[%c0_66, %c0_67] : memref<32x128xf32, #tpu.memory_space<vmem>>, vector<32x128xf32>
    %cst_68 = arith.constant dense<0.000000e+00> : vector<8x128xf32>
    %194 = tpu.matmul %192, %193, %cst_68 {dimension_numbers = #tpu.dot_dimension_numbers<[1], [0], [0], [1], [0, 0, 1, 1], [], []>} : vector<8x32xf32>, vector<32x128xf32>, vector<8x128xf32> -> vector<8x128xf32>
    %c0_69 = arith.constant 0 : index
    %c0_70 = arith.constant 0 : index
    %195 = vector.load %arg18[%c0_69, %c0_70] : memref<1x128xf32, #tpu.memory_space<vmem>>, vector<1x128xf32>
    %196 = vector.broadcast %195 : vector<1x128xf32> to vector<8x128xf32>
    %197 = arith.addf %194, %196 : vector<8x128xf32>
    %198 = arith.mulf %197, %197 : vector<8x128xf32>
    %199 = arith.mulf %197, %198 : vector<8x128xf32>
    %cst_71 = arith.constant 4.471500e-02 : f32
    %200 = vector.broadcast %cst_71 : f32 to vector<8x128xf32>
    %201 = arith.mulf %200, %199 : vector<8x128xf32>
    %202 = arith.addf %197, %201 : vector<8x128xf32>
    %cst_72 = arith.constant 0.797884583 : f32
    %203 = vector.broadcast %cst_72 : f32 to vector<8x128xf32>
    %204 = arith.mulf %203, %202 : vector<8x128xf32>
    %205 = math.tanh %204 : vector<8x128xf32>
    %cst_73 = arith.constant 1.000000e+00 : f32
    %206 = vector.broadcast %cst_73 : f32 to vector<8x128xf32>
    %207 = arith.addf %206, %205 : vector<8x128xf32>
    %cst_74 = arith.constant 5.000000e-01 : f32
    %208 = vector.broadcast %cst_74 : f32 to vector<8x128xf32>
    %209 = arith.mulf %208, %207 : vector<8x128xf32>
    %210 = arith.mulf %197, %209 : vector<8x128xf32>
    %c0_75 = arith.constant 0 : index
    %c0_76 = arith.constant 0 : index
    %211 = vector.load %arg19[%c0_75, %c0_76] : memref<128x32xf32, #tpu.memory_space<vmem>>, vector<128x32xf32>
    %cst_77 = arith.constant dense<0.000000e+00> : vector<8x32xf32>
    %212 = tpu.matmul %210, %211, %cst_77 {dimension_numbers = #tpu.dot_dimension_numbers<[1], [0], [0], [1], [0, 0, 1, 1], [], []>} : vector<8x128xf32>, vector<128x32xf32>, vector<8x32xf32> -> vector<8x32xf32>
    %c0_78 = arith.constant 0 : index
    %c0_79 = arith.constant 0 : index
    %213 = vector.load %arg20[%c0_78, %c0_79] : memref<1x32xf32, #tpu.memory_space<vmem>>, vector<1x32xf32>
    %214 = vector.broadcast %213 : vector<1x32xf32> to vector<8x32xf32>
    %215 = arith.addf %212, %214 : vector<8x32xf32>
    %216 = arith.mulf %188, %215 : vector<8x32xf32>
    %217 = arith.addf %164, %216 : vector<8x32xf32>
    %c0_80 = arith.constant 0 : index
    %c0_81 = arith.constant 0 : index
    %c0_82 = arith.constant 0 : index
    %218 = vector.load %arg21[%c0_80, %c0_81, %c0_82] : memref<1x8x32xf32, #tpu.memory_space<vmem>>, vector<1x8x32xf32>
    %219 = vector.shape_cast %218 : vector<1x8x32xf32> to vector<8x32xf32>
    %220 = vector.shape_cast %217 : vector<8x32xf32> to vector<1x8x32xf32>
    tpu.vector_store %arg21[%c0_80, %c0_81, %c0_82], %220 {strides = array<i32>} : memref<1x8x32xf32, #tpu.memory_space<vmem>>, vector<1x8x32xf32>,
    return
  }
  func.func @transform_0(%arg0: i32, %arg1: i32) -> (i32, i32, i32) {
    %c0_i32 = arith.constant 0 : i32
    %c0_i32_0 = arith.constant 0 : i32
    return %arg0, %arg1, %c0_i32 : i32, i32, i32
  }
  func.func @transform_1(%arg0: i32, %arg1: i32) -> (i32, i32, i32, i32) {
    %c0_i32 = arith.constant 0 : i32
    %c0_i32_0 = arith.constant 0 : i32
    %c0_i32_1 = arith.constant 0 : i32
    return %arg0, %arg1, %c0_i32, %c0_i32_0 : i32, i32, i32, i32
  }
  func.func @transform_2(%arg0: i32, %arg1: i32) -> (i32, i32, i32) {
    %c0_i32 = arith.constant 0 : i32
    %c0_i32_0 = arith.constant 0 : i32
    %c0_i32_1 = arith.constant 0 : i32
    return %arg1, %c0_i32, %c0_i32_0 : i32, i32, i32
  }
  func.func @transform_3(%arg0: i32, %arg1: i32) -> (i32, i32, i32) {
    %c0_i32 = arith.constant 0 : i32
    %c0_i32_0 = arith.constant 0 : i32
    %c0_i32_1 = arith.constant 0 : i32
    return %arg0, %c0_i32, %c0_i32_0 : i32, i32, i32
  }
  func.func @transform_4(%arg0: i32, %arg1: i32) -> (i32, i32, i32) {
    %c0_i32 = arith.constant 0 : i32
    %c0_i32_0 = arith.constant 0 : i32
    %c0_i32_1 = arith.constant 0 : i32
    return %arg0, %c0_i32, %c0_i32_0 : i32, i32, i32
  }
  func.func @transform_5(%arg0: i32, %arg1: i32) -> (i32, i32) {
    %c0_i32 = arith.constant 0 : i32
    %c0_i32_0 = arith.constant 0 : i32
    %c0_i32_1 = arith.constant 0 : i32
    return %c0_i32, %c0_i32_0 : i32, i32
  }
  func.func @transform_6(%arg0: i32, %arg1: i32) -> (i32, i32) {
    %c0_i32 = arith.constant 0 : i32
    %c0_i32_0 = arith.constant 0 : i32
    %c0_i32_1 = arith.constant 0 : i32
    return %c0_i32, %c0_i32_0 : i32, i32
  }
  func.func @transform_7(%arg0: i32, %arg1: i32) -> (i32, i32) {
    %c0_i32 = arith.constant 0 : i32
    %c0_i32_0 = arith.constant 0 : i32
    %c0_i32_1 = arith.constant 0 : i32
    return %c0_i32, %c0_i32_0 : i32, i32
  }
  func.func @transform_8(%arg0: i32, %arg1: i32) -> (i32, i32) {
    %c0_i32 = arith.constant 0 : i32
    %c0_i32_0 = arith.constant 0 : i32
    %c0_i32_1 = arith.constant 0 : i32
    return %c0_i32, %c0_i32_0 : i32, i32
  }
  func.func @transform_9(%arg0: i32, %arg1: i32) -> (i32, i32) {
    %c0_i32 = arith.constant 0 : i32
    %c0_i32_0 = arith.constant 0 : i32
    %c0_i32_1 = arith.constant 0 : i32
    return %c0_i32, %c0_i32_0 : i32, i32
  }
  func.func @transform_10(%arg0: i32, %arg1: i32) -> (i32, i32) {
    %c0_i32 = arith.constant 0 : i32
    %c0_i32_0 = arith.constant 0 : i32
    %c0_i32_1 = arith.constant 0 : i32
    return %c0_i32, %c0_i32_0 : i32, i32
  }
  func.func @transform_11(%arg0: i32, %arg1: i32) -> (i32, i32) {
    %c0_i32 = arith.constant 0 : i32
    %c0_i32_0 = arith.constant 0 : i32
    %c0_i32_1 = arith.constant 0 : i32
    return %c0_i32, %c0_i32_0 : i32, i32
  }
  func.func @transform_12(%arg0: i32, %arg1: i32) -> (i32, i32) {
    %c0_i32 = arith.constant 0 : i32
    %c0_i32_0 = arith.constant 0 : i32
    %c0_i32_1 = arith.constant 0 : i32
    return %c0_i32, %c0_i32_0 : i32, i32
  }
  func.func @transform_13(%arg0: i32, %arg1: i32) -> (i32, i32) {
    %c0_i32 = arith.constant 0 : i32
    %c0_i32_0 = arith.constant 0 : i32
    %c0_i32_1 = arith.constant 0 : i32
    return %c0_i32, %c0_i32_0 : i32, i32
  }
  func.func @transform_14(%arg0: i32, %arg1: i32) -> (i32, i32) {
    %c0_i32 = arith.constant 0 : i32
    %c0_i32_0 = arith.constant 0 : i32
    %c0_i32_1 = arith.constant 0 : i32
    return %c0_i32, %c0_i32_0 : i32, i32
  }
  func.func @transform_15(%arg0: i32, %arg1: i32) -> (i32, i32) {
    %c0_i32 = arith.constant 0 : i32
    %c0_i32_0 = arith.constant 0 : i32
    %c0_i32_1 = arith.constant 0 : i32
    return %c0_i32, %c0_i32_0 : i32, i32
  }
  func.func @transform_16(%arg0: i32, %arg1: i32) -> (i32, i32) {
    %c0_i32 = arith.constant 0 : i32
    %c0_i32_0 = arith.constant 0 : i32
    %c0_i32_1 = arith.constant 0 : i32
    return %c0_i32, %c0_i32_0 : i32, i32
  }
  func.func @transform_17(%arg0: i32, %arg1: i32) -> (i32, i32) {
    %c0_i32 = arith.constant 0 : i32
    %c0_i32_0 = arith.constant 0 : i32
    %c0_i32_1 = arith.constant 0 : i32
    return %c0_i32, %c0_i32_0 : i32, i32
  }
  func.func @transform_18(%arg0: i32, %arg1: i32) -> (i32, i32) {
    %c0_i32 = arith.constant 0 : i32
    %c0_i32_0 = arith.constant 0 : i32
    %c0_i32_1 = arith.constant 0 : i32
    return %c0_i32, %c0_i32_0 : i32, i32
  }
  func.func @transform_19(%arg0: i32, %arg1: i32) -> (i32, i32, i32) {
    %c0_i32 = arith.constant 0 : i32
    %c0_i32_0 = arith.constant 0 : i32
    return %arg0, %arg1, %c0_i32 : i32, i32, i32
  }
}

</mosaic_0001>

<llo_original>
// kernel: tpu_custom_call.1
$region0: #{tpu_custom_call.1}
  #allocation0 [shape = 'u32[]', space=smem, size = 0x4, offset = 0x4, fixed_abs, tag = 'smem constant byte address 0x4 - core index']
  #allocation1 [shape = 'u32[72,128]{1,0:T(1,128)}', space=vmem, size = 0x9000, scoped, tag = 'internal scratch']
  %s0 = inlined_call_operand.vmem [shape: f32[2,64,32], index: 0, kind: input, shape index: {}]
  %s1 = inlined_call_operand.vmem [shape: f32[2,8,8,32], index: 1, kind: input, shape index: {}]
  %s2 = inlined_call_operand.vmem [shape: f32[8,8,8], index: 2, kind: input, shape index: {}]
  %s3 = inlined_call_operand.hbm [shape: f32[2,8,96], index: 3, kind: input, shape index: {}]
  %s4 = inlined_call_operand.hbm [shape: f32[2,8,96], index: 4, kind: input, shape index: {}]
  %s5 = inlined_call_operand.vmem [shape: f32[32,96], index: 5, kind: input, shape index: {}]
  %s6 = inlined_call_operand.vmem [shape: f32[1,96], index: 6, kind: input, shape index: {}]
  %s7 = inlined_call_operand.vmem [shape: f32[32,32], index: 7, kind: input, shape index: {}]
  %s8 = inlined_call_operand.vmem [shape: f32[1,32], index: 8, kind: input, shape index: {}]
  %s9 = inlined_call_operand.vmem [shape: f32[32,32], index: 9, kind: input, shape index: {}]
  %s10 = inlined_call_operand.vmem [shape: f32[1,32], index: 10, kind: input, shape index: {}]
  %s11 = inlined_call_operand.vmem [shape: f32[32,64], index: 11, kind: input, shape index: {}]
  %s12 = inlined_call_operand.vmem [shape: f32[1,64], index: 12, kind: input, shape index: {}]
  %s13 = inlined_call_operand.hbm [shape: f32[32,32], index: 13, kind: input, shape index: {}]
  %s14 = inlined_call_operand.vmem [shape: f32[1,32], index: 14, kind: input, shape index: {}]
  %s15 = inlined_call_operand.hbm [shape: f32[32,128], index: 15, kind: input, shape index: {}]
  %s16 = inlined_call_operand.vmem [shape: f32[1,128], index: 16, kind: input, shape index: {}]
  %s17 = inlined_call_operand.vmem [shape: f32[128,32], index: 17, kind: input, shape index: {}]
  %s18 = inlined_call_operand.vmem [shape: f32[1,32], index: 18, kind: input, shape index: {}]
  %s19 = inlined_call_operand.vmem [shape: f32[2,64,32], index: 19, kind: output, shape index: {}]
  %s20 = sld [smem:[#allocation0]]
  $region125: #{tpu_custom_call.1} parent=0
    _
  %s22 = ssub.s32 1, %s20
  %s23 = scalar_select 0, %s22, %s20
  $region1: #{tpu_custom_call.1} parent=0
    #allocation2 [shape = 'u8[8192]{0}', space=vmem, size = 0x2000, scoped, tag = 'input window, operand 3']
    #allocation3 [shape = 's32[2]{0}', space=sflag, size = 0x8, scoped, tag = 'scoped memory for tpu_custom_call.1']
    #allocation4 [shape = 'u8[8192]{0}', space=vmem, size = 0x2000, scoped, tag = 'input window, operand 4']
    #allocation5 [shape = 's32[2]{0}', space=sflag, size = 0x8, scoped, tag = 'scoped memory for tpu_custom_call.1']
    #allocation6 [shape = 'u8[16384]{0}', space=vmem, size = 0x4000, scoped, tag = 'input window, operand 13, single buffered']
    #allocation7 [shape = 'u8[16384]{0}', space=vmem, size = 0x4000, scoped, tag = 'input window, operand 15, single buffered']
    #allocation8 [shape = 's32[1]{0}', space=sflag, size = 0x4, scoped, tag = 'scoped memory for tpu_custom_call.1']
    %24 = vsyncpa [#allocation3], 0
    %s25 = scalar_lea.sflag [#allocation3], 1
    %26 = vsyncpa %s25, 0
    %27 = vsyncpa [#allocation5], 0
    %s28 = scalar_lea.sflag [#allocation5], 1
    %29 = vsyncpa %s28, 0
    %30 = vsyncpa [#allocation8], 0
    loop: start=0, step=1, limit=18
    $region2: #{tpu_custom_call.1} parent=1 // loop_pre_header
      _
    $region3: #{tpu_custom_call.1} parent=1 // loop_header
      %s32 = sphi 0, %s36
      %p33 = scmp.ge.s32.totalorder %s32, 18
      %s39 = sphi 0, %s51
      %s40 = sphi 0, %s47
      %s41 = sphi 0, %s39
      %s42 = sphi 0, %s40
      %s43 = sphi 0, %s41
      %s44 = sphi 0, %s42
      %s56 = sphi 0, %s58
      %s59 = sphi 0, %s56
      %s60 = sphi 0, %s59
      %s76 = sphi 0, %s60
      %s84 = sphi 0, %s86
      %s87 = sphi 0, %s84
      %s88 = sphi 0, %s87
      %s104 = sphi 0, %s88
      %s110 = sphi 0, %s112
      %s113 = sphi 0, %s110
      %s114 = sphi 0, %s113
      %s130 = sphi 0, %s114
      %s136 = sphi 0, %s138
      %s139 = sphi 0, %s136
      %s140 = sphi 0, %s139
      %s156 = sphi 0, %s140
      %s162 = sphi 0, %s164
      %s165 = sphi 0, %s162
      %s166 = sphi 0, %s165
      %s182 = sphi 0, %s166
      %s186 = sphi 0, %s186
      %s188 = sphi 0, %s186
      %s189 = sphi 0, %s188
      %s203 = sphi 0, %s189
      %s207 = sphi 0, %s207
      %s209 = sphi 0, %s207
      %s210 = sphi 0, %s209
      %s224 = sphi 0, %s210
      %s228 = sphi 0, %s228
      %s230 = sphi 0, %s228
      %s231 = sphi 0, %s230
      %s245 = sphi 0, %s231
      %s249 = sphi 0, %s249
      %s251 = sphi 0, %s249
      %s252 = sphi 0, %s251
      %s266 = sphi 0, %s252
      %s270 = sphi 0, %s270
      %s272 = sphi 0, %s270
      %s273 = sphi 0, %s272
      %s287 = sphi 0, %s273
      %s291 = sphi 0, %s291
      %s293 = sphi 0, %s291
      %s294 = sphi 0, %s293
      %s308 = sphi 0, %s294
      %s312 = sphi 0, %s312
      %s314 = sphi 0, %s312
      %s315 = sphi 0, %s314
      %s329 = sphi 0, %s315
      %s333 = sphi 0, %s333
      %s335 = sphi 0, %s333
      %s336 = sphi 0, %s335
      %s350 = sphi 0, %s336
      %s354 = sphi 0, %s354
      %s356 = sphi 0, %s354
      %s357 = sphi 0, %s356
      %s371 = sphi 0, %s357
      %s375 = sphi 0, %s375
      %s377 = sphi 0, %s375
      %s378 = sphi 0, %s377
      %s392 = sphi 0, %s378
      %s396 = sphi 0, %s396
      %s398 = sphi 0, %s396
      %s399 = sphi 0, %s398
      %s413 = sphi 0, %s399
      %s417 = sphi 0, %s417
      %s419 = sphi 0, %s417
      %s420 = sphi 0, %s419
      %s434 = sphi 0, %s420
      %s438 = sphi 0, %s438
      %s440 = sphi 0, %s438
      %s441 = sphi 0, %s440
      %s455 = sphi 0, %s441
      %s459 = sphi 0, %s459
      %s461 = sphi 0, %s459
      %s462 = sphi 0, %s461
      %s476 = sphi 0, %s462
      %s484 = sphi 0, %s486
      %s487 = sphi 0, %s484
      %s488 = sphi 0, %s487
      %s504 = sphi 0, %s488
    $region4: #{tpu_custom_call.1} parent=1 // loop_header_branch
      %35 = sbr.rel (%p33) target = $region8
    $region5: #{tpu_custom_call.1} parent=1 // loop_body
      %s37 = ssub.s32 %s32, 1
      %s38 = ssub.s32 %s32, 2
      %s45 = sadd.s32 1, %s40
      %p46 = scmp.ge.s32.totalorder %s45, 8
      %s47 = scalar_select %p46, 0, %s45
      %s48 = sadd.s32 1, %s39
      %s49 = scalar_select %p46, %s48, %s39
      %p50 = scmp.ge.s32.totalorder %s49, 2
      %s51 = scalar_select %p50, 0, %s49
      %s52 = ssub.s32 %s39, %s51
      %s53 = ssub.s32 %s40, %s47
      %s54 = sor.u32 %s52, %s53
      %p55 = scmp.eq.s32.totalorder %s54, 0
      %s57 = sadd.s32 %s56, 1
      %s58 = scalar_select %p55, %s56, %s57
      %p61 = pneg %p55
      %p62 = scmp.eq.s32.totalorder %s32, 15
      %p63 = por %p61, %p62
      %p64 = scmp.ne.s32.totalorder %s56, %s59
      %p65 = scmp.eq.s32.totalorder %s32, 0
      %p66 = por %p64, %p65
      %p67 = scmp.ne.s32.totalorder %s56, %s59
      %p68 = scmp.eq.s32.totalorder %s37, 15
      %p69 = por %p67, %p68
      %p70 = scmp.ne.s32.totalorder %s59, %s60
      %p71 = scmp.eq.s32.totalorder %s37, 0
      %p72 = por %p70, %p71
      %p73 = scmp.ne.s32.totalorder %s59, %s60
      %p74 = scmp.eq.s32.totalorder %s38, 15
      %p75 = por %p73, %p74
      %p77 = scmp.ne.s32.totalorder %s60, %s76
      %p78 = scmp.eq.s32.totalorder %s38, 0
      %p79 = por %p77, %p78
      %s80 = ssub.s32 %s39, %s51
      %s81 = ssub.s32 %s40, %s47
      %s82 = sor.u32 %s80, %s81
      %p83 = scmp.eq.s32.totalorder %s82, 0
      %s85 = sadd.s32 %s84, 1
      %s86 = scalar_select %p83, %s84, %s85
      %p89 = pneg %p83
      %p90 = scmp.eq.s32.totalorder %s32, 15
      %p91 = por %p89, %p90
      %p92 = scmp.ne.s32.totalorder %s84, %s87
      %p93 = scmp.eq.s32.totalorder %s32, 0
      %p94 = por %p92, %p93
      %p95 = scmp.ne.s32.totalorder %s84, %s87
      %p96 = scmp.eq.s32.totalorder %s37, 15
      %p97 = por %p95, %p96
      %p98 = scmp.ne.s32.totalorder %s87, %s88
      %p99 = scmp.eq.s32.totalorder %s37, 0
      %p100 = por %p98, %p99
      %p101 = scmp.ne.s32.totalorder %s87, %s88
      %p102 = scmp.eq.s32.totalorder %s38, 15
      %p103 = por %p101, %p102
      %p105 = scmp.ne.s32.totalorder %s88, %s104
      %p106 = scmp.eq.s32.totalorder %s38, 0
      %p107 = por %p105, %p106
      %s108 = ssub.s32 %s40, %s47
      %p109 = scmp.eq.s32.totalorder %s108, 0
      %s111 = sadd.s32 %s110, 1
      %s112 = scalar_select %p109, %s110, %s111
      %p115 = pneg %p109
      %p116 = scmp.eq.s32.totalorder %s32, 15
      %p117 = por %p115, %p116
      %p118 = scmp.ne.s32.totalorder %s110, %s113
      %p119 = scmp.eq.s32.totalorder %s32, 0
      %p120 = por %p118, %p119
      %p121 = scmp.ne.s32.totalorder %s110, %s113
      %p122 = scmp.eq.s32.totalorder %s37, 15
      %p123 = por %p121, %p122
      %p124 = scmp.ne.s32.totalorder %s113, %s114
      %p125 = scmp.eq.s32.totalorder %s37, 0
      %p126 = por %p124, %p125
      %p127 = scmp.ne.s32.totalorder %s113, %s114
      %p128 = scmp.eq.s32.totalorder %s38, 15
      %p129 = por %p127, %p128
      %p131 = scmp.ne.s32.totalorder %s114, %s130
      %p132 = scmp.eq.s32.totalorder %s38, 0
      %p133 = por %p131, %p132
      %s134 = ssub.s32 %s39, %s51
      %p135 = scmp.eq.s32.totalorder %s134, 0
      %s137 = sadd.s32 %s136, 1
      %s138 = scalar_select %p135, %s136, %s137
      %p141 = pneg %p135
      %p142 = scmp.eq.s32.totalorder %s32, 15
      %p143 = por %p141, %p142
      %p144 = scmp.ne.s32.totalorder %s136, %s139
      %p145 = scmp.eq.s32.totalorder %s32, 0
      %p146 = por %p144, %p145
      %p147 = scmp.ne.s32.totalorder %s136, %s139
      %p148 = scmp.eq.s32.totalorder %s37, 15
      %p149 = por %p147, %p148
      %p150 = scmp.ne.s32.totalorder %s139, %s140
      %p151 = scmp.eq.s32.totalorder %s37, 0
      %p152 = por %p150, %p151
      %p153 = scmp.ne.s32.totalorder %s139, %s140
      %p154 = scmp.eq.s32.totalorder %s38, 15
      %p155 = por %p153, %p154
      %p157 = scmp.ne.s32.totalorder %s140, %s156
      %p158 = scmp.eq.s32.totalorder %s38, 0
      %p159 = por %p157, %p158
      %s160 = ssub.s32 %s39, %s51
      %p161 = scmp.eq.s32.totalorder %s160, 0
      %s163 = sadd.s32 %s162, 1
      %s164 = scalar_select %p161, %s162, %s163
      %p167 = pneg %p161
      %p168 = scmp.eq.s32.totalorder %s32, 15
      %p169 = por %p167, %p168
      %p170 = scmp.ne.s32.totalorder %s162, %s165
      %p171 = scmp.eq.s32.totalorder %s32, 0
      %p172 = por %p170, %p171
      %p173 = scmp.ne.s32.totalorder %s162, %s165
      %p174 = scmp.eq.s32.totalorder %s37, 15
      %p175 = por %p173, %p174
      %p176 = scmp.ne.s32.totalorder %s165, %s166
      %p177 = scmp.eq.s32.totalorder %s37, 0
      %p178 = por %p176, %p177
      %p179 = scmp.ne.s32.totalorder %s165, %s166
      %p180 = scmp.eq.s32.totalorder %s38, 15
      %p181 = por %p179, %p180
      %p183 = scmp.ne.s32.totalorder %s166, %s182
      %p184 = scmp.eq.s32.totalorder %s38, 0
      %p185 = por %p183, %p184
      %s187 = sadd.s32 %s186, 1
      %p190 = scmp.eq.s32.totalorder %s32, 15
      %p191 = scmp.ne.s32.totalorder %s186, %s188
      %p192 = scmp.eq.s32.totalorder %s32, 0
      %p193 = por %p191, %p192
      %p194 = scmp.ne.s32.totalorder %s186, %s188
      %p195 = scmp.eq.s32.totalorder %s37, 15
      %p196 = por %p194, %p195
      %p197 = scmp.ne.s32.totalorder %s188, %s189
      %p198 = scmp.eq.s32.totalorder %s37, 0
      %p199 = por %p197, %p198
      %p200 = scmp.ne.s32.totalorder %s188, %s189
      %p201 = scmp.eq.s32.totalorder %s38, 15
      %p202 = por %p200, %p201
      %p204 = scmp.ne.s32.totalorder %s189, %s203
      %p205 = scmp.eq.s32.totalorder %s38, 0
      %p206 = por %p204, %p205
      %s208 = sadd.s32 %s207, 1
      %p211 = scmp.eq.s32.totalorder %s32, 15
      %p212 = scmp.ne.s32.totalorder %s207, %s209
      %p213 = scmp.eq.s32.totalorder %s32, 0
      %p214 = por %p212, %p213
      %p215 = scmp.ne.s32.totalorder %s207, %s209
      %p216 = scmp.eq.s32.totalorder %s37, 15
      %p217 = por %p215, %p216
      %p218 = scmp.ne.s32.totalorder %s209, %s210
      %p219 = scmp.eq.s32.totalorder %s37, 0
      %p220 = por %p218, %p219
      %p221 = scmp.ne.s32.totalorder %s209, %s210
      %p222 = scmp.eq.s32.totalorder %s38, 15
      %p223 = por %p221, %p222
      %p225 = scmp.ne.s32.totalorder %s210, %s224
      %p226 = scmp.eq.s32.totalorder %s38, 0
      %p227 = por %p225, %p226
      %s229 = sadd.s32 %s228, 1
      %p232 = scmp.eq.s32.totalorder %s32, 15
      %p233 = scmp.ne.s32.totalorder %s228, %s230
      %p234 = scmp.eq.s32.totalorder %s32, 0
      %p235 = por %p233, %p234
      %p236 = scmp.ne.s32.totalorder %s228, %s230
      %p237 = scmp.eq.s32.totalorder %s37, 15
      %p238 = por %p236, %p237
      %p239 = scmp.ne.s32.totalorder %s230, %s231
      %p240 = scmp.eq.s32.totalorder %s37, 0
      %p241 = por %p239, %p240
      %p242 = scmp.ne.s32.totalorder %s230, %s231
      %p243 = scmp.eq.s32.totalorder %s38, 15
      %p244 = por %p242, %p243
      %p246 = scmp.ne.s32.totalorder %s231, %s245
      %p247 = scmp.eq.s32.totalorder %s38, 0
      %p248 = por %p246, %p247
      %s250 = sadd.s32 %s249, 1
      %p253 = scmp.eq.s32.totalorder %s32, 15
      %p254 = scmp.ne.s32.totalorder %s249, %s251
      %p255 = scmp.eq.s32.totalorder %s32, 0
      %p256 = por %p254, %p255
      %p257 = scmp.ne.s32.totalorder %s249, %s251
      %p258 = scmp.eq.s32.totalorder %s37, 15
      %p259 = por %p257, %p258
      %p260 = scmp.ne.s32.totalorder %s251, %s252
      %p261 = scmp.eq.s32.totalorder %s37, 0
      %p262 = por %p260, %p261
      %p263 = scmp.ne.s32.totalorder %s251, %s252
      %p264 = scmp.eq.s32.totalorder %s38, 15
      %p265 = por %p263, %p264
      %p267 = scmp.ne.s32.totalorder %s252, %s266
      %p268 = scmp.eq.s32.totalorder %s38, 0
      %p269 = por %p267, %p268
      %s271 = sadd.s32 %s270, 1
      %p274 = scmp.eq.s32.totalorder %s32, 15
      %p275 = scmp.ne.s32.totalorder %s270, %s272
      %p276 = scmp.eq.s32.totalorder %s32, 0
      %p277 = por %p275, %p276
      %p278 = scmp.ne.s32.totalorder %s270, %s272
      %p279 = scmp.eq.s32.totalorder %s37, 15
      %p280 = por %p278, %p279
      %p281 = scmp.ne.s32.totalorder %s272, %s273
      %p282 = scmp.eq.s32.totalorder %s37, 0
      %p283 = por %p281, %p282
      %p284 = scmp.ne.s32.totalorder %s272, %s273
      %p285 = scmp.eq.s32.totalorder %s38, 15
      %p286 = por %p284, %p285
      %p288 = scmp.ne.s32.totalorder %s273, %s287
      %p289 = scmp.eq.s32.totalorder %s38, 0
      %p290 = por %p288, %p289
      %s292 = sadd.s32 %s291, 1
      %p295 = scmp.eq.s32.totalorder %s32, 15
      %p296 = scmp.ne.s32.totalorder %s291, %s293
      %p297 = scmp.eq.s32.totalorder %s32, 0
      %p298 = por %p296, %p297
      %p299 = scmp.ne.s32.totalorder %s291, %s293
      %p300 = scmp.eq.s32.totalorder %s37, 15
      %p301 = por %p299, %p300
      %p302 = scmp.ne.s32.totalorder %s293, %s294
      %p303 = scmp.eq.s32.totalorder %s37, 0
      %p304 = por %p302, %p303
      %p305 = scmp.ne.s32.totalorder %s293, %s294
      %p306 = scmp.eq.s32.totalorder %s38, 15
      %p307 = por %p305, %p306
      %p309 = scmp.ne.s32.totalorder %s294, %s308
      %p310 = scmp.eq.s32.totalorder %s38, 0
      %p311 = por %p309, %p310
      %s313 = sadd.s32 %s312, 1
      %p316 = scmp.eq.s32.totalorder %s32, 15
      %p317 = scmp.ne.s32.totalorder %s312, %s314
      %p318 = scmp.eq.s32.totalorder %s32, 0
      %p319 = por %p317, %p318
      %p320 = scmp.ne.s32.totalorder %s312, %s314
      %p321 = scmp.eq.s32.totalorder %s37, 15
      %p322 = por %p320, %p321
      %p323 = scmp.ne.s32.totalorder %s314, %s315
      %p324 = scmp.eq.s32.totalorder %s37, 0
      %p325 = por %p323, %p324
      %p326 = scmp.ne.s32.totalorder %s314, %s315
      %p327 = scmp.eq.s32.totalorder %s38, 15
      %p328 = por %p326, %p327
      %p330 = scmp.ne.s32.totalorder %s315, %s329
      %p331 = scmp.eq.s32.totalorder %s38, 0
      %p332 = por %p330, %p331
      %s334 = sadd.s32 %s333, 1
      %p337 = scmp.eq.s32.totalorder %s32, 15
      %p338 = scmp.ne.s32.totalorder %s333, %s335
      %p339 = scmp.eq.s32.totalorder %s32, 0
      %p340 = por %p338, %p339
      %p341 = scmp.ne.s32.totalorder %s333, %s335
      %p342 = scmp.eq.s32.totalorder %s37, 15
      %p343 = por %p341, %p342
      %p344 = scmp.ne.s32.totalorder %s335, %s336
      %p345 = scmp.eq.s32.totalorder %s37, 0
      %p346 = por %p344, %p345
      %p347 = scmp.ne.s32.totalorder %s335, %s336
      %p348 = scmp.eq.s32.totalorder %s38, 15
      %p349 = por %p347, %p348
      %p351 = scmp.ne.s32.totalorder %s336, %s350
      %p352 = scmp.eq.s32.totalorder %s38, 0
      %p353 = por %p351, %p352
      %s355 = sadd.s32 %s354, 1
      %p358 = scmp.eq.s32.totalorder %s32, 15
      %p359 = scmp.ne.s32.totalorder %s354, %s356
      %p360 = scmp.eq.s32.totalorder %s32, 0
      %p361 = por %p359, %p360
      %p362 = scmp.ne.s32.totalorder %s354, %s356
      %p363 = scmp.eq.s32.totalorder %s37, 15
      %p364 = por %p362, %p363
      %p365 = scmp.ne.s32.totalorder %s356, %s357
      %p366 = scmp.eq.s32.totalorder %s37, 0
      %p367 = por %p365, %p366
      %p368 = scmp.ne.s32.totalorder %s356, %s357
      %p369 = scmp.eq.s32.totalorder %s38, 15
      %p370 = por %p368, %p369
      %p372 = scmp.ne.s32.totalorder %s357, %s371
      %p373 = scmp.eq.s32.totalorder %s38, 0
      %p374 = por %p372, %p373
      %s376 = sadd.s32 %s375, 1
      %p379 = scmp.eq.s32.totalorder %s32, 15
      %p380 = scmp.ne.s32.totalorder %s375, %s377
      %p381 = scmp.eq.s32.totalorder %s32, 0
      %p382 = por %p380, %p381
      %p383 = scmp.ne.s32.totalorder %s375, %s377
      %p384 = scmp.eq.s32.totalorder %s37, 15
      %p385 = por %p383, %p384
      %p386 = scmp.ne.s32.totalorder %s377, %s378
      %p387 = scmp.eq.s32.totalorder %s37, 0
      %p388 = por %p386, %p387
      %p389 = scmp.ne.s32.totalorder %s377, %s378
      %p390 = scmp.eq.s32.totalorder %s38, 15
      %p391 = por %p389, %p390
      %p393 = scmp.ne.s32.totalorder %s378, %s392
      %p394 = scmp.eq.s32.totalorder %s38, 0
      %p395 = por %p393, %p394
      %s397 = sadd.s32 %s396, 1
      %p400 = scmp.eq.s32.totalorder %s32, 15
      %p401 = scmp.ne.s32.totalorder %s396, %s398
      %p402 = scmp.eq.s32.totalorder %s32, 0
      %p403 = por %p401, %p402
      %p404 = scmp.ne.s32.totalorder %s396, %s398
      %p405 = scmp.eq.s32.totalorder %s37, 15
      %p406 = por %p404, %p405
      %p407 = scmp.ne.s32.totalorder %s398, %s399
      %p408 = scmp.eq.s32.totalorder %s37, 0
      %p409 = por %p407, %p408
      %p410 = scmp.ne.s32.totalorder %s398, %s399
      %p411 = scmp.eq.s32.totalorder %s38, 15
      %p412 = por %p410, %p411
      %p414 = scmp.ne.s32.totalorder %s399, %s413
      %p415 = scmp.eq.s32.totalorder %s38, 0
      %p416 = por %p414, %p415
      %s418 = sadd.s32 %s417, 1
      %p421 = scmp.eq.s32.totalorder %s32, 15
      %p422 = scmp.ne.s32.totalorder %s417, %s419
      %p423 = scmp.eq.s32.totalorder %s32, 0
      %p424 = por %p422, %p423
      %p425 = scmp.ne.s32.totalorder %s417, %s419
      %p426 = scmp.eq.s32.totalorder %s37, 15
      %p427 = por %p425, %p426
      %p428 = scmp.ne.s32.totalorder %s419, %s420
      %p429 = scmp.eq.s32.totalorder %s37, 0
      %p430 = por %p428, %p429
      %p431 = scmp.ne.s32.totalorder %s419, %s420
      %p432 = scmp.eq.s32.totalorder %s38, 15
      %p433 = por %p431, %p432
      %p435 = scmp.ne.s32.totalorder %s420, %s434
      %p436 = scmp.eq.s32.totalorder %s38, 0
      %p437 = por %p435, %p436
      %s439 = sadd.s32 %s438, 1
      %p442 = scmp.eq.s32.totalorder %s32, 15
      %p443 = scmp.ne.s32.totalorder %s438, %s440
      %p444 = scmp.eq.s32.totalorder %s32, 0
      %p445 = por %p443, %p444
      %p446 = scmp.ne.s32.totalorder %s438, %s440
      %p447 = scmp.eq.s32.totalorder %s37, 15
      %p448 = por %p446, %p447
      %p449 = scmp.ne.s32.totalorder %s440, %s441
      %p450 = scmp.eq.s32.totalorder %s37, 0
      %p451 = por %p449, %p450
      %p452 = scmp.ne.s32.totalorder %s440, %s441
      %p453 = scmp.eq.s32.totalorder %s38, 15
      %p454 = por %p452, %p453
      %p456 = scmp.ne.s32.totalorder %s441, %s455
      %p457 = scmp.eq.s32.totalorder %s38, 0
      %p458 = por %p456, %p457
      %s460 = sadd.s32 %s459, 1
      %p463 = scmp.eq.s32.totalorder %s32, 15
      %p464 = scmp.ne.s32.totalorder %s459, %s461
      %p465 = scmp.eq.s32.totalorder %s32, 0
      %p466 = por %p464, %p465
      %p467 = scmp.ne.s32.totalorder %s459, %s461
      %p468 = scmp.eq.s32.totalorder %s37, 15
      %p469 = por %p467, %p468
      %p470 = scmp.ne.s32.totalorder %s461, %s462
      %p471 = scmp.eq.s32.totalorder %s37, 0
      %p472 = por %p470, %p471
      %p473 = scmp.ne.s32.totalorder %s461, %s462
      %p474 = scmp.eq.s32.totalorder %s38, 15
      %p475 = por %p473, %p474
      %p477 = scmp.ne.s32.totalorder %s462, %s476
      %p478 = scmp.eq.s32.totalorder %s38, 0
      %p479 = por %p477, %p478
      %s480 = ssub.s32 %s39, %s51
      %s481 = ssub.s32 %s40, %s47
      %s482 = sor.u32 %s480, %s481
      %p483 = scmp.eq.s32.totalorder %s482, 0
      %s485 = sadd.s32 %s484, 1
      %s486 = scalar_select %p483, %s484, %s485
      %p489 = pneg %p483
      %p490 = scmp.eq.s32.totalorder %s32, 15
      %p491 = por %p489, %p490
      %p492 = scmp.ne.s32.totalorder %s484, %s487
      %p493 = scmp.eq.s32.totalorder %s32, 0
      %p494 = por %p492, %p493
      %p495 = scmp.ne.s32.totalorder %s484, %s487
      %p496 = scmp.eq.s32.totalorder %s37, 15
      %p497 = por %p495, %p496
      %p498 = scmp.ne.s32.totalorder %s487, %s488
      %p499 = scmp.eq.s32.totalorder %s37, 0
      %p500 = por %p498, %p499
      %p501 = scmp.ne.s32.totalorder %s487, %s488
      %p502 = scmp.eq.s32.totalorder %s38, 15
      %p503 = por %p501, %p502
      %p505 = scmp.ne.s32.totalorder %s488, %s504
      %p506 = scmp.eq.s32.totalorder %s38, 0
      %p507 = por %p505, %p506
      %p508 = scmp.le.s32.totalorder 1, %s32
      %p509 = scmp.lt.s32.totalorder %s32, 17
      %p510 = pnand %p508, %p509
      %p511 = pneg %p510
      // Predicated region
      $region9: #{tpu_custom_call.1} parent=5 // pred_check
        _
      $region10: #{tpu_custom_call.1} parent=5 // pred_check_branch
        %513 = sbr.rel (%p510) target = $region12
      $region11: #{tpu_custom_call.1} parent=5 // pred_region
        %s514 = ssub.s32 %s32, 1
        // Predicated region
        $region13: #{tpu_custom_call.1} parent=11 // pred_check
          %p515 = pneg %p199
        $region14: #{tpu_custom_call.1} parent=11 // pred_check_branch
          %517 = sbr.rel (%p515) target = $region16
        $region15: #{tpu_custom_call.1} parent=11 // pred_region
          _
        $region16: #{tpu_custom_call.1} parent=11 // pred_fallthru
          _
        // Predicated region
        $region17: #{tpu_custom_call.1} parent=11 // pred_check
          %p518 = pneg %p220
        $region18: #{tpu_custom_call.1} parent=11 // pred_check_branch
          %520 = sbr.rel (%p518) target = $region20
        $region19: #{tpu_custom_call.1} parent=11 // pred_region
          _
        $region20: #{tpu_custom_call.1} parent=11 // pred_fallthru
          _
        // Predicated region
        $region21: #{tpu_custom_call.1} parent=11 // pred_check
          %p521 = pneg %p241
        $region22: #{tpu_custom_call.1} parent=11 // pred_check_branch
          %523 = sbr.rel (%p521) target = $region24
        $region23: #{tpu_custom_call.1} parent=11 // pred_region
          _
        $region24: #{tpu_custom_call.1} parent=11 // pred_fallthru
          _
        // Predicated region
        $region25: #{tpu_custom_call.1} parent=11 // pred_check
          %p524 = pneg %p262
        $region26: #{tpu_custom_call.1} parent=11 // pred_check_branch
          %526 = sbr.rel (%p524) target = $region28
        $region27: #{tpu_custom_call.1} parent=11 // pred_region
          _
        $region28: #{tpu_custom_call.1} parent=11 // pred_fallthru
          _
        // Predicated region
        $region29: #{tpu_custom_call.1} parent=11 // pred_check
          %p527 = pneg %p283
        $region30: #{tpu_custom_call.1} parent=11 // pred_check_branch
          %529 = sbr.rel (%p527) target = $region32
        $region31: #{tpu_custom_call.1} parent=11 // pred_region
          _
        $region32: #{tpu_custom_call.1} parent=11 // pred_fallthru
          _
        // Predicated region
        $region33: #{tpu_custom_call.1} parent=11 // pred_check
          %p530 = pneg %p304
        $region34: #{tpu_custom_call.1} parent=11 // pred_check_branch
          %532 = sbr.rel (%p530) target = $region36
        $region35: #{tpu_custom_call.1} parent=11 // pred_region
          _
        $region36: #{tpu_custom_call.1} parent=11 // pred_fallthru
          _
        // Predicated region
        $region37: #{tpu_custom_call.1} parent=11 // pred_check
          %p533 = pneg %p325
        $region38: #{tpu_custom_call.1} parent=11 // pred_check_branch
          %535 = sbr.rel (%p533) target = $region40
        $region39: #{tpu_custom_call.1} parent=11 // pred_region
          _
        $region40: #{tpu_custom_call.1} parent=11 // pred_fallthru
          _
        // Predicated region
        $region41: #{tpu_custom_call.1} parent=11 // pred_check
          %p536 = pneg %p346
        $region42: #{tpu_custom_call.1} parent=11 // pred_check_branch
          %538 = sbr.rel (%p536) target = $region44
        $region43: #{tpu_custom_call.1} parent=11 // pred_region
          _
        $region44: #{tpu_custom_call.1} parent=11 // pred_fallthru
          _
        // Predicated region
        $region45: #{tpu_custom_call.1} parent=11 // pred_check
          %p539 = pneg %p367
        $region46: #{tpu_custom_call.1} parent=11 // pred_check_branch
          %541 = sbr.rel (%p539) target = $region48
        $region47: #{tpu_custom_call.1} parent=11 // pred_region
          %543 = vsyncadd [#allocation5], 0
          %s544 = sshll.u32 %s13, 4
          %s545 = int_to_ptr.hbm [resolvable:$true] %s544
          %s546 = sshll.u32 [#allocation6], 4
          %s547 = int_to_ptr.vmem [resolvable:$true] %s546
          %552 = dma.hbm_to_vmem [thread:$0]  %s545, 512, %s547, [#allocation5], 128, 128, 8
        $region48: #{tpu_custom_call.1} parent=11 // pred_fallthru
          _
        // Predicated region
        $region49: #{tpu_custom_call.1} parent=11 // pred_check
          %p553 = pneg %p388
        $region50: #{tpu_custom_call.1} parent=11 // pred_check_branch
          %555 = sbr.rel (%p553) target = $region52
        $region51: #{tpu_custom_call.1} parent=11 // pred_region
          _
        $region52: #{tpu_custom_call.1} parent=11 // pred_fallthru
          _
        // Predicated region
        $region53: #{tpu_custom_call.1} parent=11 // pred_check
          %p556 = pneg %p409
        $region54: #{tpu_custom_call.1} parent=11 // pred_check_branch
          %558 = sbr.rel (%p556) target = $region56
        $region55: #{tpu_custom_call.1} parent=11 // pred_region
          %560 = vsyncadd [#allocation8], 0
          %s561 = sshll.u32 %s15, 4
          %s562 = int_to_ptr.hbm [resolvable:$true] %s561
          %s563 = sshll.u32 [#allocation7], 4
          %s564 = int_to_ptr.vmem [resolvable:$true] %s563
          %569 = dma.hbm_to_vmem [thread:$0]  %s562, 512, %s564, [#allocation8], 128, 128, 8
        $region56: #{tpu_custom_call.1} parent=11 // pred_fallthru
          _
        // Predicated region
        $region57: #{tpu_custom_call.1} parent=11 // pred_check
          %p570 = pneg %p430
        $region58: #{tpu_custom_call.1} parent=11 // pred_check_branch
          %572 = sbr.rel (%p570) target = $region60
        $region59: #{tpu_custom_call.1} parent=11 // pred_region
          _
        $region60: #{tpu_custom_call.1} parent=11 // pred_fallthru
          _
        // Predicated region
        $region61: #{tpu_custom_call.1} parent=11 // pred_check
          %p573 = pneg %p451
        $region62: #{tpu_custom_call.1} parent=11 // pred_check_branch
          %575 = sbr.rel (%p573) target = $region64
        $region63: #{tpu_custom_call.1} parent=11 // pred_region
          _
        $region64: #{tpu_custom_call.1} parent=11 // pred_fallthru
          _
        // Predicated region
        $region65: #{tpu_custom_call.1} parent=11 // pred_check
          %p576 = pneg %p472
        $region66: #{tpu_custom_call.1} parent=11 // pred_check_branch
          %578 = sbr.rel (%p576) target = $region68
        $region67: #{tpu_custom_call.1} parent=11 // pred_region
          _
        $region68: #{tpu_custom_call.1} parent=11 // pred_fallthru
          _
      $region12: #{tpu_custom_call.1} parent=5 // pred_fallthru
        _
      %p579 = scmp.lt.s32.totalorder %s32, 16
      // Predicated region
      $region69: #{tpu_custom_call.1} parent=5 // pred_check
        %p580 = pneg %p579
      $region70: #{tpu_custom_call.1} parent=5 // pred_check_branch
        %582 = sbr.rel (%p580) target = $region72
      $region71: #{tpu_custom_call.1} parent=5 // pred_region
        // Predicated region
        $region73: #{tpu_custom_call.1} parent=71 // pred_check
          %p583 = pneg %p66
        $region74: #{tpu_custom_call.1} parent=71 // pred_check_branch
          %585 = sbr.rel (%p583) target = $region76
        $region75: #{tpu_custom_call.1} parent=71 // pred_region
          %p586 = scmp.lt.s32.totalorder %s39, 1
          %s587 = scalar_select %p586, %s39, 1
          %p588 = scmp.lt.s32.totalorder %s40, 7
          %s589 = scalar_select %p588, %s40, 7
          %s590 = smul.addr %s587, 8
          %s591 = sadd.s32 %s589, %s590
          %s592 = smul.addr %s591, 8
          %s593 = scalar_lea.vmem %s0, %s592
        $region76: #{tpu_custom_call.1} parent=71 // pred_fallthru
          _
        // Predicated region
        $region77: #{tpu_custom_call.1} parent=71 // pred_check
          %p594 = pneg %p94
        $region78: #{tpu_custom_call.1} parent=71 // pred_check_branch
          %596 = sbr.rel (%p594) target = $region80
        $region79: #{tpu_custom_call.1} parent=71 // pred_region
          %p597 = scmp.lt.s32.totalorder %s39, 1
          %s598 = scalar_select %p597, %s39, 1
          %p599 = scmp.lt.s32.totalorder %s40, 7
          %s600 = scalar_select %p599, %s40, 7
          %s601 = smul.addr %s598, 8
          %s602 = sadd.s32 %s600, %s601
          %s603 = smul.addr %s602, 8
          %s604 = scalar_lea.vmem %s1, %s603
        $region80: #{tpu_custom_call.1} parent=71 // pred_fallthru
          _
        // Predicated region
        $region81: #{tpu_custom_call.1} parent=71 // pred_check
          %p605 = pneg %p120
        $region82: #{tpu_custom_call.1} parent=71 // pred_check_branch
          %607 = sbr.rel (%p605) target = $region84
        $region83: #{tpu_custom_call.1} parent=71 // pred_region
          %p608 = scmp.lt.s32.totalorder %s40, 7
          %s609 = scalar_select %p608, %s40, 7
          %s610 = smul.addr %s609, 8
          %s611 = scalar_lea.vmem %s2, %s610
        $region84: #{tpu_custom_call.1} parent=71 // pred_fallthru
          _
        // Predicated region
        $region85: #{tpu_custom_call.1} parent=71 // pred_check
          %p612 = pneg %p146
        $region86: #{tpu_custom_call.1} parent=71 // pred_check_branch
          %614 = sbr.rel (%p612) target = $region88
        $region87: #{tpu_custom_call.1} parent=71 // pred_region
          %s615 = sand.u32 %s136, 1
          %s616 = scalar_lea.sflag [#allocation3], %s615
          %s617 = sand.u32 %s136, 1
          %s618 = smul.addr %s617, 8
          %s619 = scalar_lea.vmem [#allocation2], %s618
          %621 = vsyncadd %s616, 0
          %s622 = smul.addr %s39, 8
          %s623 = scalar_lea.hbm %s3, %s622
          %s625 = sshll.u32 %s623, 4
          %s626 = int_to_ptr.hbm [resolvable:$true] %s625
          %s627 = sshll.u32 %s619, 4
          %s628 = int_to_ptr.vmem [resolvable:$true] %s627
          %630 = dma.hbm_to_vmem [thread:$0]  %s626, 128, %s628, %s616
        $region88: #{tpu_custom_call.1} parent=71 // pred_fallthru
          _
        // Predicated region
        $region89: #{tpu_custom_call.1} parent=71 // pred_check
          %p631 = pneg %p172
        $region90: #{tpu_custom_call.1} parent=71 // pred_check_branch
          %633 = sbr.rel (%p631) target = $region92
        $region91: #{tpu_custom_call.1} parent=71 // pred_region
          %s634 = sand.u32 %s32, 1
          %s635 = scalar_lea.sflag [#allocation5], %s634
          %s636 = sand.u32 %s162, 1
          %s637 = smul.addr %s636, 8
          %s638 = scalar_lea.vmem [#allocation4], %s637
          %640 = vsyncadd %s635, 0
          %s641 = smul.addr %s39, 8
          %s642 = scalar_lea.hbm %s4, %s641
          %s644 = sshll.u32 %s642, 4
          %s645 = int_to_ptr.hbm [resolvable:$true] %s644
          %s646 = sshll.u32 %s638, 4
          %s647 = int_to_ptr.vmem [resolvable:$true] %s646
          %649 = dma.hbm_to_vmem [thread:$0]  %s645, 128, %s647, %s635
        $region92: #{tpu_custom_call.1} parent=71 // pred_fallthru
          _
      $region72: #{tpu_custom_call.1} parent=5 // pred_fallthru
        _
      %p650 = scmp.le.s32.totalorder 1, %s32
      %p651 = scmp.lt.s32.totalorder %s32, 17
      %p652 = pnand %p650, %p651
      %p653 = pneg %p652
      // Predicated region
      $region93: #{tpu_custom_call.1} parent=5 // pred_check
        _
      $region94: #{tpu_custom_call.1} parent=5 // pred_check_branch
        %655 = sbr.rel (%p652) target = $region96
      $region95: #{tpu_custom_call.1} parent=5 // pred_region
        %s656 = ssub.s32 %s32, 1
        %s657 = sand.u32 %s139, 1
        %s658 = scalar_lea.sflag [#allocation3], %s657
        %s659 = sand.u32 %s139, 1
        %s660 = smul.addr %s659, 8
        %s661 = scalar_lea.vmem [#allocation2], %s660
        // Predicated region
        $region97: #{tpu_custom_call.1} parent=95 // pred_check
          %p662 = pneg %p152
        $region98: #{tpu_custom_call.1} parent=95 // pred_check_branch
          %664 = sbr.rel (%p662) target = $region100
        $region99: #{tpu_custom_call.1} parent=95 // pred_region
          %666 = dma.done %s658, 128
        $region100: #{tpu_custom_call.1} parent=95 // pred_fallthru
          _
        %s667 = sand.u32 %s37, 1
        %s668 = scalar_lea.sflag [#allocation5], %s667
        %s669 = sand.u32 %s165, 1
        %s670 = smul.addr %s669, 8
        %s671 = scalar_lea.vmem [#allocation4], %s670
        // Predicated region
        $region101: #{tpu_custom_call.1} parent=95 // pred_check
          %p672 = pneg %p178
        $region102: #{tpu_custom_call.1} parent=95 // pred_check_branch
          %674 = sbr.rel (%p672) target = $region104
        $region103: #{tpu_custom_call.1} parent=95 // pred_region
          %676 = dma.done %s668, 128
        $region104: #{tpu_custom_call.1} parent=95 // pred_fallthru
          _
        // Predicated region
        $region105: #{tpu_custom_call.1} parent=95 // pred_check
          %p677 = pneg %p367
        $region106: #{tpu_custom_call.1} parent=95 // pred_check_branch
          %679 = sbr.rel (%p677) target = $region108
        $region107: #{tpu_custom_call.1} parent=95 // pred_region
          %681 = dma.done [#allocation5], 512
        $region108: #{tpu_custom_call.1} parent=95 // pred_fallthru
          _
        // Predicated region
        $region109: #{tpu_custom_call.1} parent=95 // pred_check
          %p682 = pneg %p409
        $region110: #{tpu_custom_call.1} parent=95 // pred_check_branch
          %684 = sbr.rel (%p682) target = $region112
        $region111: #{tpu_custom_call.1} parent=95 // pred_region
          %686 = dma.done [#allocation8], 512
        $region112: #{tpu_custom_call.1} parent=95 // pred_fallthru
          _
        %p687 = scmp.lt.s32.totalorder %s41, 1
        %s688 = scalar_select %p687, %s41, 1
        %p689 = scmp.lt.s32.totalorder %s42, 7
        %s690 = scalar_select %p689, %s42, 7
        %s691 = smul.addr %s688, 8
        %s692 = sadd.s32 %s690, %s691
        %s693 = smul.addr %s692, 8
        %s694 = scalar_lea.vmem %s0, %s693
        %p695 = pneg %p72
        %p696 = pneg %p69
        %p697 = scmp.lt.s32.totalorder %s41, 1
        %s698 = scalar_select %p697, %s41, 1
        %p699 = scmp.lt.s32.totalorder %s42, 7
        %s700 = scalar_select %p699, %s42, 7
        %s701 = smul.addr %s698, 8
        %s702 = sadd.s32 %s700, %s701
        %s703 = smul.addr %s702, 8
        %s704 = scalar_lea.vmem %s1, %s703
        %p705 = pneg %p100
        %p706 = pneg %p97
        %p707 = scmp.lt.s32.totalorder %s42, 7
        %s708 = scalar_select %p707, %s42, 7
        %s709 = smul.addr %s708, 8
        %s710 = scalar_lea.vmem %s2, %s709
        %p711 = pneg %p126
        %p712 = pneg %p123
        %s713 = sand.u32 %s139, 1
        %s714 = scalar_lea.sflag [#allocation3], %s713
        %s715 = sand.u32 %s139, 1
        %s716 = smul.addr %s715, 8
        %s717 = scalar_lea.vmem [#allocation2], %s716
        %p718 = pneg %p152
        %p719 = pneg %p149
        %s720 = sand.u32 %s37, 1
        %s721 = scalar_lea.sflag [#allocation5], %s720
        %s722 = sand.u32 %s165, 1
        %s723 = smul.addr %s722, 8
        %s724 = scalar_lea.vmem [#allocation4], %s723
        %p725 = pneg %p178
        %p726 = pneg %p175
        %p727 = pneg %p199
        %p728 = pneg %p196
        %p729 = pneg %p220
        %p730 = pneg %p217
        %p731 = pneg %p241
        %p732 = pneg %p238
        %p733 = pneg %p262
        %p734 = pneg %p259
        %p735 = pneg %p283
        %p736 = pneg %p280
        %p737 = pneg %p304
        %p738 = pneg %p301
        %p739 = pneg %p325
        %p740 = pneg %p322
        %p741 = pneg %p346
        %p742 = pneg %p343
        %p743 = pneg %p367
        %p744 = pneg %p364
        %p745 = pneg %p388
        %p746 = pneg %p385
        %p747 = pneg %p409
        %p748 = pneg %p406
        %p749 = pneg %p430
        %p750 = pneg %p427
        %p751 = pneg %p451
        %p752 = pneg %p448
        %p753 = pneg %p472
        %p754 = pneg %p469
        %p755 = pneg %p500
        %p756 = pneg %p497
        %p757 = scmp.lt.s32.totalorder %s41, 1
        %s758 = scalar_select %p757, %s41, 1
        %p759 = scmp.lt.s32.totalorder %s42, 7
        %s760 = scalar_select %p759, %s42, 7
        %s761 = smul.addr %s758, 8
        %s762 = sadd.s32 %s760, %s761
        %s763 = smul.addr %s762, 8
        %s764 = scalar_lea.vmem %s19, %s763
        %p765 = scmp.lt.s32.totalorder %s41, 1
        %s766 = scalar_select %p765, %s41, 1
        %p767 = scmp.lt.s32.totalorder %s42, 7
        %s768 = scalar_select %p767, %s42, 7
        %s769 = smul.addr %s766, 8
        %s770 = sadd.s32 %s768, %s769
        %s771 = smul.addr %s770, 8
        %s772 = scalar_lea.vmem %s0, %s771
        %p773 = scmp.lt.s32.totalorder %s41, 1
        %s774 = scalar_select %p773, %s41, 1
        %p775 = scmp.lt.s32.totalorder %s42, 7
        %s776 = scalar_select %p775, %s42, 7
        %s777 = smul.addr %s774, 8
        %s778 = sadd.s32 %s776, %s777
        %s779 = smul.addr %s778, 8
        %s780 = scalar_lea.vmem %s1, %s779
        %p781 = scmp.lt.s32.totalorder %s42, 7
        %s782 = scalar_select %p781, %s42, 7
        %s783 = smul.addr %s782, 8
        %s784 = scalar_lea.vmem %s2, %s783
        %p785 = scmp.lt.s32.totalorder %s41, 1
        %s786 = scalar_select %p785, %s41, 1
        %p787 = scmp.lt.s32.totalorder %s42, 7
        %s788 = scalar_select %p787, %s42, 7
        %s789 = smul.addr %s786, 8
        %s790 = sadd.s32 %s788, %s789
        %s791 = smul.addr %s790, 8
        %s792 = scalar_lea.vmem %s19, %s791
        %v793 = vld [vmem:[%s772] sm:$0xff]
        %vm794 = vcmask 261120
        %v795 = vsel %vm794, %v793, 0.0
        %796 = vadd.xlane.f32.xlu0 %v795
        %v797 = vpop.xlane.xlu0 %796
        %v798 = vrcp.pop 32.0
        %v799 = vmul.f32 32.0, %v798
        %v800 = vsub.f32 1.0, %v799
        %v801 = vmul.f32 %v798, %v800
        %v802 = vadd.f32 %v798, %v801
        %vm803 = vweird.f32 %v798
        %v804 = vsel %vm803, %v798, %v802
        %v805 = vmul.f32 %v797, %v804
        %v806 = vsub.f32 %v793, %v805
        %v807 = vmul.f32 %v806, %v806
        %v808 = vsel %vm794, %v807, 0.0
        %809 = vadd.xlane.f32.xlu0 %v808
        %v810 = vpop.xlane.xlu0 %809
        %v811 = vmul.f32 %v810, %v804
        %v812 = vadd.f32 %v811, 1e-06
        %v813 = vrsqrt.pop %v812
        %v814 = vmul.f32 %v813, %v812
        %v815 = vmul.f32 %v814, %v813
        %v816 = vmul.f32 0.5, %v815
        %v817 = vsub.f32 1.5, %v816
        %v818 = vmul.f32 %v813, %v817
        %vm819 = vweird.f32 %v812
        %vm820 = vweird.f32 %v813
        %vm821 = vmor %vm819, %vm820
        %v822 = vsel %vm821, %v813, %v818
        %v823 = vmul.f32 %v806, %v822
        %v824 = vld [vmem:[%s784] sm:$0xff]
        %v825 = vld [vmem:[%s661] sm:$0xff]
        %vm826 = vcmask 64512
        %v828 = vsel %vm826, %v824, 0
        %830 = vmatpush.msra.mxu0 0.0
        %831 = vmatpush.msra.mxu0 0.0
        %832 = vmatpush.msra.mxu0 0.0
        %833 = vmatpush.msra.mxu0 0.0
        %834 = vmatpush.msra.mxu0 0.0
        %835 = vmatpush.msra.mxu0 0.0
        %836 = vmatpush.msra.mxu0 0.0
        %837 = vmatpush.msra.mxu0 0.0
        %838 = vmatpush.msra.mxu0 0.0
        %839 = vmatpush.msra.mxu0 0.0
        %840 = vmatpush.msra.mxu0 0.0
        %841 = vmatpush.msra.mxu0 0.0
        %842 = vmatpush.msra.mxu0 0.0
        %843 = vmatpush.msra.mxu0 0.0
        %844 = vmatpush.msra.mxu0 0.0
        %845 = vmatpush.msra.mxu0 %v825
        %846 = vmatmul.f32.gmra.mxu0 %v828
        %v847 = vpop.f32.mrf.mxu0
        %v848 = vadd.f32 0.0, %v847
        %849 = vdwg.mxu0
        %v850 = vadd.f32 %v848, 1.0
        %852 = vrot.lane.b32.xlu0 %v850, 96
        %v853 = vpop.permute.xlu0 %852
        %v855 = vmul.f32 %v823, %v853
        %v856 = vadd.f32 %v855, %v848
        %v857 = vld [vmem:[%s5] sm:$0xff]
        %v858 = vld [vmem:[%s5 + $0x8] sm:$0xff]
        %v859 = vld [vmem:[%s5 + $0x10] sm:$0xff]
        %v860 = vld [vmem:[%s5 + $0x18] sm:$0xff]
        %v861 = vld [vmem:[%s6] sm:$0x1]
        %v863 = vperm.slane %v861, 0
        %v866 = vsel %vm794, %v856, 0
        %868 = vmatpush.msra.mxu0 0.0
        %869 = vmatpush.msra.mxu0 0.0
        %870 = vmatpush.msra.mxu0 0.0
        %871 = vmatpush.msra.mxu0 0.0
        %872 = vmatpush.msra.mxu0 0.0
        %873 = vmatpush.msra.mxu0 0.0
        %874 = vmatpush.msra.mxu0 0.0
        %875 = vmatpush.msra.mxu0 0.0
        %876 = vmatpush.msra.mxu0 0.0
        %877 = vmatpush.msra.mxu0 0.0
        %878 = vmatpush.msra.mxu0 0.0
        %879 = vmatpush.msra.mxu0 0.0
        %880 = vmatpush.msra.mxu0 %v860
        %881 = vmatpush.msra.mxu0 %v859
        %882 = vmatpush.msra.mxu0 %v858
        %883 = vmatpush.msra.mxu0 %v857
        %884 = vmatmul.f32.gmra.mxu0 %v866
        %v885 = vpop.f32.mrf.mxu0
        %v886 = vadd.f32 %v863, %v885
        %887 = vdwg.mxu0
        %889 = vrot.lane.b32.xlu0 %v886, 120
        %v890 = vpop.permute.xlu0 %889
        %891 = vrot.lane.b32.xlu0 %v886, 112
        %v892 = vpop.permute.xlu0 %891
        %893 = vrot.lane.b32.xlu0 %v886, 104
        %v894 = vpop.permute.xlu0 %893
        %895 = vrot.lane.b32.xlu0 %v886, 96
        %v896 = vpop.permute.xlu0 %895
        %v897 = vsel %vm826, %v886, 0
        %v899 = vsel %vm826, %v896, 0
        %901 = vmatpush.xpose.msra.mxu0 0.0
        %902 = vmatpush.xpose.msra.mxu0 0.0
        %903 = vmatpush.xpose.msra.mxu0 0.0
        %904 = vmatpush.xpose.msra.mxu0 0.0
        %905 = vmatpush.xpose.msra.mxu0 0.0
        %906 = vmatpush.xpose.msra.mxu0 0.0
        %907 = vmatpush.xpose.msra.mxu0 0.0
        %908 = vmatpush.xpose.msra.mxu0 0.0
        %909 = vmatpush.xpose.msra.mxu0 0.0
        %910 = vmatpush.xpose.msra.mxu0 0.0
        %911 = vmatpush.xpose.msra.mxu0 0.0
        %912 = vmatpush.xpose.msra.mxu0 0.0
        %913 = vmatpush.xpose.msra.mxu0 0.0
        %914 = vmatpush.xpose.msra.mxu0 0.0
        %915 = vmatpush.xpose.msra.mxu0 0.0
        %916 = vmatpush.xpose.msra.mxu0 %v899
        %917 = vmatmul.f32.gmra.mxu0 %v897
        %v918 = vpop.f32.mrf.mxu0
        %v919 = vadd.f32 0.0, %v918
        %920 = vdwg.mxu0
        %921 = vrot.lane.b32.xlu0 %v890, 96
        %v922 = vpop.permute.xlu0 %921
        %v923 = vsel %vm826, %v890, 0
        %v925 = vsel %vm826, %v922, 0
        %927 = vmatpush.xpose.msra.mxu0 0.0
        %928 = vmatpush.xpose.msra.mxu0 0.0
        %929 = vmatpush.xpose.msra.mxu0 0.0
        %930 = vmatpush.xpose.msra.mxu0 0.0
        %931 = vmatpush.xpose.msra.mxu0 0.0
        %932 = vmatpush.xpose.msra.mxu0 0.0
        %933 = vmatpush.xpose.msra.mxu0 0.0
        %934 = vmatpush.xpose.msra.mxu0 0.0
        %935 = vmatpush.xpose.msra.mxu0 0.0
        %936 = vmatpush.xpose.msra.mxu0 0.0
        %937 = vmatpush.xpose.msra.mxu0 0.0
        %938 = vmatpush.xpose.msra.mxu0 0.0
        %939 = vmatpush.xpose.msra.mxu0 0.0
        %940 = vmatpush.xpose.msra.mxu0 0.0
        %941 = vmatpush.xpose.msra.mxu0 0.0
        %942 = vmatpush.xpose.msra.mxu0 %v925
        %943 = vmatmul.f32.gmra.mxu0 %v923
        %v944 = vpop.f32.mrf.mxu0
        %v945 = vadd.f32 0.0, %v944
        %946 = vdwg.mxu0
        %947 = vrot.lane.b32.xlu0 %v892, 96
        %v948 = vpop.permute.xlu0 %947
        %v949 = vsel %vm826, %v892, 0
        %v951 = vsel %vm826, %v948, 0
        %953 = vmatpush.xpose.msra.mxu0 0.0
        %954 = vmatpush.xpose.msra.mxu0 0.0
        %955 = vmatpush.xpose.msra.mxu0 0.0
        %956 = vmatpush.xpose.msra.mxu0 0.0
        %957 = vmatpush.xpose.msra.mxu0 0.0
        %958 = vmatpush.xpose.msra.mxu0 0.0
        %959 = vmatpush.xpose.msra.mxu0 0.0
        %960 = vmatpush.xpose.msra.mxu0 0.0
        %961 = vmatpush.xpose.msra.mxu0 0.0
        %962 = vmatpush.xpose.msra.mxu0 0.0
        %963 = vmatpush.xpose.msra.mxu0 0.0
        %964 = vmatpush.xpose.msra.mxu0 0.0
        %965 = vmatpush.xpose.msra.mxu0 0.0
        %966 = vmatpush.xpose.msra.mxu0 0.0
        %967 = vmatpush.xpose.msra.mxu0 0.0
        %968 = vmatpush.xpose.msra.mxu0 %v951
        %969 = vmatmul.f32.gmra.mxu0 %v949
        %v970 = vpop.f32.mrf.mxu0
        %v971 = vadd.f32 0.0, %v970
        %972 = vdwg.mxu0
        %973 = vrot.lane.b32.xlu0 %v894, 96
        %v974 = vpop.permute.xlu0 %973
        %v975 = vsel %vm826, %v894, 0
        %v977 = vsel %vm826, %v974, 0
        %979 = vmatpush.xpose.msra.mxu0 0.0
        %980 = vmatpush.xpose.msra.mxu0 0.0
        %981 = vmatpush.xpose.msra.mxu0 0.0
        %982 = vmatpush.xpose.msra.mxu0 0.0
        %983 = vmatpush.xpose.msra.mxu0 0.0
        %984 = vmatpush.xpose.msra.mxu0 0.0
        %985 = vmatpush.xpose.msra.mxu0 0.0
        %986 = vmatpush.xpose.msra.mxu0 0.0
        %987 = vmatpush.xpose.msra.mxu0 0.0
        %988 = vmatpush.xpose.msra.mxu0 0.0
        %989 = vmatpush.xpose.msra.mxu0 0.0
        %990 = vmatpush.xpose.msra.mxu0 0.0
        %991 = vmatpush.xpose.msra.mxu0 0.0
        %992 = vmatpush.xpose.msra.mxu0 0.0
        %993 = vmatpush.xpose.msra.mxu0 0.0
        %994 = vmatpush.xpose.msra.mxu0 %v977
        %995 = vmatmul.f32.gmra.mxu0 %v975
        %v996 = vpop.f32.mrf.mxu0
        %v997 = vadd.f32 0.0, %v996
        %998 = vdwg.mxu0
        %v999 = vmul.f32 %v919, 0.35355338
        %v1000 = vmul.f32 %v945, 0.35355338
        %v1001 = vmul.f32 %v971, 0.35355338
        %v1002 = vmul.f32 %v997, 0.35355338
        %v1003 = vsel %vm826, %v999, -inf
        %1004 = vmax.xlane.f32.xlu0 %v1003
        %v1005 = vpop.xlane.xlu0 %1004
        %v1006 = vsel %vm826, %v1000, -inf
        %1007 = vmax.xlane.f32.xlu0 %v1006
        %v1008 = vpop.xlane.xlu0 %1007
        %v1009 = vsel %vm826, %v1001, -inf
        %1010 = vmax.xlane.f32.xlu0 %v1009
        %v1011 = vpop.xlane.xlu0 %1010
        %v1012 = vsel %vm826, %v1002, -inf
        %1013 = vmax.xlane.f32.xlu0 %v1012
        %v1014 = vpop.xlane.xlu0 %1013
        %v1015 = vsub.f32 %v999, %v1005
        %v1016 = vsub.f32 %v1000, %v1008
        %v1017 = vsub.f32 %v1001, %v1011
        %v1018 = vsub.f32 %v1002, %v1014
        %v1019 = vmul.f32 %v1015, 1.442695
        %v1020 = vpow.pop %v1019
        %v1021 = vmul.f32 %v1016, 1.442695
        %v1022 = vpow.pop %v1021
        %v1023 = vmul.f32 %v1017, 1.442695
        %v1024 = vpow.pop %v1023
        %v1025 = vmul.f32 %v1018, 1.442695
        %v1026 = vpow.pop %v1025
        %v1027 = vsel %vm826, %v1020, 0.0
        %1028 = vadd.xlane.f32.xlu0 %v1027
        %v1029 = vpop.xlane.xlu0 %1028
        %v1030 = vsel %vm826, %v1022, 0.0
        %1031 = vadd.xlane.f32.xlu0 %v1030
        %v1032 = vpop.xlane.xlu0 %1031
        %v1033 = vsel %vm826, %v1024, 0.0
        %1034 = vadd.xlane.f32.xlu0 %v1033
        %v1035 = vpop.xlane.xlu0 %1034
        %v1036 = vsel %vm826, %v1026, 0.0
        %1037 = vadd.xlane.f32.xlu0 %v1036
        %v1038 = vpop.xlane.xlu0 %1037
        %v1039 = vrcp.pop %v1029
        %v1040 = vrcp.pop %v1032
        %v1041 = vrcp.pop %v1035
        %v1042 = vrcp.pop %v1038
        %v1043 = vmul.f32 %v1020, %v1039
        %v1044 = vmul.f32 %v1022, %v1040
        %v1045 = vmul.f32 %v1024, %v1041
        %v1046 = vmul.f32 %v1026, %v1042
        %1047 = vrot.lane.b32.xlu0 %v886, 64
        %v1048 = vpop.permute.xlu0 %1047
        %v1051 = vsel %vm826, %v1043, 0
        %1053 = vmatpush.msra.mxu0 0.0
        %1054 = vmatpush.msra.mxu0 0.0
        %1055 = vmatpush.msra.mxu0 0.0
        %1056 = vmatpush.msra.mxu0 0.0
        %1057 = vmatpush.msra.mxu0 0.0
        %1058 = vmatpush.msra.mxu0 0.0
        %1059 = vmatpush.msra.mxu0 0.0
        %1060 = vmatpush.msra.mxu0 0.0
        %1061 = vmatpush.msra.mxu0 0.0
        %1062 = vmatpush.msra.mxu0 0.0
        %1063 = vmatpush.msra.mxu0 0.0
        %1064 = vmatpush.msra.mxu0 0.0
        %1065 = vmatpush.msra.mxu0 0.0
        %1066 = vmatpush.msra.mxu0 0.0
        %1067 = vmatpush.msra.mxu0 0.0
        %1068 = vmatpush.msra.mxu0 %v1048
        %1069 = vmatmul.f32.gmra.mxu0 %v1051
        %v1070 = vpop.f32.mrf.mxu0
        %v1071 = vadd.f32 0.0, %v1070
        %1072 = vdwg.mxu0
        %1073 = vrot.lane.b32.xlu0 %v890, 64
        %v1074 = vpop.permute.xlu0 %1073
        %v1077 = vsel %vm826, %v1044, 0
        %1079 = vmatpush.msra.mxu0 0.0
        %1080 = vmatpush.msra.mxu0 0.0
        %1081 = vmatpush.msra.mxu0 0.0
        %1082 = vmatpush.msra.mxu0 0.0
        %1083 = vmatpush.msra.mxu0 0.0
        %1084 = vmatpush.msra.mxu0 0.0
        %1085 = vmatpush.msra.mxu0 0.0
        %1086 = vmatpush.msra.mxu0 0.0
        %1087 = vmatpush.msra.mxu0 0.0
        %1088 = vmatpush.msra.mxu0 0.0
        %1089 = vmatpush.msra.mxu0 0.0
        %1090 = vmatpush.msra.mxu0 0.0
        %1091 = vmatpush.msra.mxu0 0.0
        %1092 = vmatpush.msra.mxu0 0.0
        %1093 = vmatpush.msra.mxu0 0.0
        %1094 = vmatpush.msra.mxu0 %v1074
        %1095 = vmatmul.f32.gmra.mxu0 %v1077
        %v1096 = vpop.f32.mrf.mxu0
        %v1097 = vadd.f32 0.0, %v1096
        %1098 = vdwg.mxu0
        %1099 = vrot.lane.b32.xlu0 %v892, 64
        %v1100 = vpop.permute.xlu0 %1099
        %v1103 = vsel %vm826, %v1045, 0
        %1105 = vmatpush.msra.mxu0 0.0
        %1106 = vmatpush.msra.mxu0 0.0
        %1107 = vmatpush.msra.mxu0 0.0
        %1108 = vmatpush.msra.mxu0 0.0
        %1109 = vmatpush.msra.mxu0 0.0
        %1110 = vmatpush.msra.mxu0 0.0
        %1111 = vmatpush.msra.mxu0 0.0
        %1112 = vmatpush.msra.mxu0 0.0
        %1113 = vmatpush.msra.mxu0 0.0
        %1114 = vmatpush.msra.mxu0 0.0
        %1115 = vmatpush.msra.mxu0 0.0
        %1116 = vmatpush.msra.mxu0 0.0
        %1117 = vmatpush.msra.mxu0 0.0
        %1118 = vmatpush.msra.mxu0 0.0
        %1119 = vmatpush.msra.mxu0 0.0
        %1120 = vmatpush.msra.mxu0 %v1100
        %1121 = vmatmul.f32.gmra.mxu0 %v1103
        %v1122 = vpop.f32.mrf.mxu0
        %v1123 = vadd.f32 0.0, %v1122
        %1124 = vdwg.mxu0
        %1125 = vrot.lane.b32.xlu0 %v894, 64
        %v1126 = vpop.permute.xlu0 %1125
        %v1129 = vsel %vm826, %v1046, 0
        %1131 = vmatpush.msra.mxu0 0.0
        %1132 = vmatpush.msra.mxu0 0.0
        %1133 = vmatpush.msra.mxu0 0.0
        %1134 = vmatpush.msra.mxu0 0.0
        %1135 = vmatpush.msra.mxu0 0.0
        %1136 = vmatpush.msra.mxu0 0.0
        %1137 = vmatpush.msra.mxu0 0.0
        %1138 = vmatpush.msra.mxu0 0.0
        %1139 = vmatpush.msra.mxu0 0.0
        %1140 = vmatpush.msra.mxu0 0.0
        %1141 = vmatpush.msra.mxu0 0.0
        %1142 = vmatpush.msra.mxu0 0.0
        %1143 = vmatpush.msra.mxu0 0.0
        %1144 = vmatpush.msra.mxu0 0.0
        %1145 = vmatpush.msra.mxu0 0.0
        %1146 = vmatpush.msra.mxu0 %v1126
        %1147 = vmatmul.f32.gmra.mxu0 %v1129
        %v1148 = vpop.f32.mrf.mxu0
        %v1149 = vadd.f32 0.0, %v1148
        %1150 = vdwg.mxu0
        %1152 = vrot.lane.b32.xlu0 %v1097, 8
        %v1153 = vpop.permute.xlu0 %1152
        %1156 = vrot.lane.b32.xlu0 %v1123, 16
        %v1157 = vpop.permute.xlu0 %1156
        %1160 = vrot.lane.b32.xlu0 %v1149, 24
        %v1161 = vpop.permute.xlu0 %1160
        %v1163 = vsel %vm826, %v1071, %v1153
        %vm1164 = vcmask 130048
        %v1165 = vsel %vm1164, %v1163, %v1157
        %vm1166 = vcmask 195584
        %v1167 = vsel %vm1166, %v1165, %v1161
        %v1168 = vld [vmem:[%s7] sm:$0xff]
        %v1169 = vld [vmem:[%s7 + $0x8] sm:$0xff]
        %v1170 = vld [vmem:[%s7 + $0x10] sm:$0xff]
        %v1171 = vld [vmem:[%s7 + $0x18] sm:$0xff]
        %v1172 = vld [vmem:[%s8] sm:$0x1]
        %v1174 = vperm.slane %v1172, 0
        %v1177 = vsel %vm794, %v1167, 0
        %1179 = vmatpush.msra.mxu0 0.0
        %1180 = vmatpush.msra.mxu0 0.0
        %1181 = vmatpush.msra.mxu0 0.0
        %1182 = vmatpush.msra.mxu0 0.0
        %1183 = vmatpush.msra.mxu0 0.0
        %1184 = vmatpush.msra.mxu0 0.0
        %1185 = vmatpush.msra.mxu0 0.0
        %1186 = vmatpush.msra.mxu0 0.0
        %1187 = vmatpush.msra.mxu0 0.0
        %1188 = vmatpush.msra.mxu0 0.0
        %1189 = vmatpush.msra.mxu0 0.0
        %1190 = vmatpush.msra.mxu0 0.0
        %1191 = vmatpush.msra.mxu0 %v1171
        %1192 = vmatpush.msra.mxu0 %v1170
        %1193 = vmatpush.msra.mxu0 %v1169
        %1194 = vmatpush.msra.mxu0 %v1168
        %1195 = vmatmul.f32.gmra.mxu0 %v1177
        %v1196 = vpop.f32.mrf.mxu0
        %v1197 = vadd.f32 %v1174, %v1196
        %1198 = vdwg.mxu0
        %1200 = vrot.lane.b32.xlu0 %v1197, 64
        %v1201 = vpop.permute.xlu0 %1200
        %v1203 = vmul.f32 %v848, %v1201
        %1205 = vrot.lane.b32.xlu0 %v1203, 64
        %v1206 = vpop.permute.xlu0 %1205
        %v1208 = vadd.f32 %v793, %v1206
        %v1209 = vld [vmem:[%s780] sm:$0xff]
        %v1210 = vld [vmem:[%s9] sm:$0xff]
        %v1211 = vld [vmem:[%s9 + $0x8] sm:$0xff]
        %v1212 = vld [vmem:[%s9 + $0x10] sm:$0xff]
        %v1213 = vld [vmem:[%s9 + $0x18] sm:$0xff]
        %v1214 = vld [vmem:[%s10] sm:$0x1]
        %v1216 = vperm.slane %v1214, 0
        %v1219 = vsel %vm794, %v1208, 0
        %1221 = vmatpush.msra.mxu0 0.0
        %1222 = vmatpush.msra.mxu0 0.0
        %1223 = vmatpush.msra.mxu0 0.0
        %1224 = vmatpush.msra.mxu0 0.0
        %1225 = vmatpush.msra.mxu0 0.0
        %1226 = vmatpush.msra.mxu0 0.0
        %1227 = vmatpush.msra.mxu0 0.0
        %1228 = vmatpush.msra.mxu0 0.0
        %1229 = vmatpush.msra.mxu0 0.0
        %1230 = vmatpush.msra.mxu0 0.0
        %1231 = vmatpush.msra.mxu0 0.0
        %1232 = vmatpush.msra.mxu0 0.0
        %1233 = vmatpush.msra.mxu0 %v1213
        %1234 = vmatpush.msra.mxu0 %v1212
        %1235 = vmatpush.msra.mxu0 %v1211
        %1236 = vmatpush.msra.mxu0 %v1210
        %1237 = vmatmul.f32.gmra.mxu0 %v1219
        %v1238 = vpop.f32.mrf.mxu0
        %v1239 = vadd.f32 %v1216, %v1238
        %1240 = vdwg.mxu0
        %v1241 = vld [vmem:[%s11] sm:$0xff]
        %v1242 = vld [vmem:[%s11 + $0x8] sm:$0xff]
        %v1243 = vld [vmem:[%s11 + $0x10] sm:$0xff]
        %v1244 = vld [vmem:[%s11 + $0x18] sm:$0xff]
        %v1245 = vld [vmem:[%s12] sm:$0x1]
        %v1247 = vperm.slane %v1245, 0
        %v1250 = vsel %vm794, %v1209, 0
        %1252 = vmatpush.msra.mxu0 0.0
        %1253 = vmatpush.msra.mxu0 0.0
        %1254 = vmatpush.msra.mxu0 0.0
        %1255 = vmatpush.msra.mxu0 0.0
        %1256 = vmatpush.msra.mxu0 0.0
        %1257 = vmatpush.msra.mxu0 0.0
        %1258 = vmatpush.msra.mxu0 0.0
        %1259 = vmatpush.msra.mxu0 0.0
        %1260 = vmatpush.msra.mxu0 0.0
        %1261 = vmatpush.msra.mxu0 0.0
        %1262 = vmatpush.msra.mxu0 0.0
        %1263 = vmatpush.msra.mxu0 0.0
        %1264 = vmatpush.msra.mxu0 %v1244
        %1265 = vmatpush.msra.mxu0 %v1243
        %1266 = vmatpush.msra.mxu0 %v1242
        %1267 = vmatpush.msra.mxu0 %v1241
        %1268 = vmatmul.f32.gmra.mxu0 %v1250
        %v1269 = vpop.f32.mrf.mxu0
        %v1270 = vadd.f32 %v1247, %v1269
        %1271 = vdwg.mxu0
        %1273 = vrot.lane.b32.xlu0 %v1239, 120
        %v1274 = vpop.permute.xlu0 %1273
        %1275 = vrot.lane.b32.xlu0 %v1239, 112
        %v1276 = vpop.permute.xlu0 %1275
        %1277 = vrot.lane.b32.xlu0 %v1239, 104
        %v1278 = vpop.permute.xlu0 %1277
        %1280 = vrot.lane.b32.xlu0 %v1270, 120
        %v1281 = vpop.permute.xlu0 %1280
        %1282 = vrot.lane.b32.xlu0 %v1270, 112
        %v1283 = vpop.permute.xlu0 %1282
        %1284 = vrot.lane.b32.xlu0 %v1270, 104
        %v1285 = vpop.permute.xlu0 %1284
        %v1286 = vsel %vm826, %v1239, 0
        %v1288 = vsel %vm826, %v1270, 0
        %1290 = vmatpush.xpose.msra.mxu0 0.0
        %1291 = vmatpush.xpose.msra.mxu0 0.0
        %1292 = vmatpush.xpose.msra.mxu0 0.0
        %1293 = vmatpush.xpose.msra.mxu0 0.0
        %1294 = vmatpush.xpose.msra.mxu0 0.0
        %1295 = vmatpush.xpose.msra.mxu0 0.0
        %1296 = vmatpush.xpose.msra.mxu0 0.0
        %1297 = vmatpush.xpose.msra.mxu0 0.0
        %1298 = vmatpush.xpose.msra.mxu0 0.0
        %1299 = vmatpush.xpose.msra.mxu0 0.0
        %1300 = vmatpush.xpose.msra.mxu0 0.0
        %1301 = vmatpush.xpose.msra.mxu0 0.0
        %1302 = vmatpush.xpose.msra.mxu0 0.0
        %1303 = vmatpush.xpose.msra.mxu0 0.0
        %1304 = vmatpush.xpose.msra.mxu0 0.0
        %1305 = vmatpush.xpose.msra.mxu0 %v1288
        %1306 = vmatmul.f32.gmra.mxu0 %v1286
        %v1307 = vpop.f32.mrf.mxu0
        %v1308 = vadd.f32 0.0, %v1307
        %1309 = vdwg.mxu0
        %v1310 = vsel %vm826, %v1274, 0
        %v1312 = vsel %vm826, %v1281, 0
        %1314 = vmatpush.xpose.msra.mxu0 0.0
        %1315 = vmatpush.xpose.msra.mxu0 0.0
        %1316 = vmatpush.xpose.msra.mxu0 0.0
        %1317 = vmatpush.xpose.msra.mxu0 0.0
        %1318 = vmatpush.xpose.msra.mxu0 0.0
        %1319 = vmatpush.xpose.msra.mxu0 0.0
        %1320 = vmatpush.xpose.msra.mxu0 0.0
        %1321 = vmatpush.xpose.msra.mxu0 0.0
        %1322 = vmatpush.xpose.msra.mxu0 0.0
        %1323 = vmatpush.xpose.msra.mxu0 0.0
        %1324 = vmatpush.xpose.msra.mxu0 0.0
        %1325 = vmatpush.xpose.msra.mxu0 0.0
        %1326 = vmatpush.xpose.msra.mxu0 0.0
        %1327 = vmatpush.xpose.msra.mxu0 0.0
        %1328 = vmatpush.xpose.msra.mxu0 0.0
        %1329 = vmatpush.xpose.msra.mxu0 %v1312
        %1330 = vmatmul.f32.gmra.mxu0 %v1310
        %v1331 = vpop.f32.mrf.mxu0
        %v1332 = vadd.f32 0.0, %v1331
        %1333 = vdwg.mxu0
        %v1334 = vsel %vm826, %v1276, 0
        %v1336 = vsel %vm826, %v1283, 0
        %1338 = vmatpush.xpose.msra.mxu0 0.0
        %1339 = vmatpush.xpose.msra.mxu0 0.0
        %1340 = vmatpush.xpose.msra.mxu0 0.0
        %1341 = vmatpush.xpose.msra.mxu0 0.0
        %1342 = vmatpush.xpose.msra.mxu0 0.0
        %1343 = vmatpush.xpose.msra.mxu0 0.0
        %1344 = vmatpush.xpose.msra.mxu0 0.0
        %1345 = vmatpush.xpose.msra.mxu0 0.0
        %1346 = vmatpush.xpose.msra.mxu0 0.0
        %1347 = vmatpush.xpose.msra.mxu0 0.0
        %1348 = vmatpush.xpose.msra.mxu0 0.0
        %1349 = vmatpush.xpose.msra.mxu0 0.0
        %1350 = vmatpush.xpose.msra.mxu0 0.0
        %1351 = vmatpush.xpose.msra.mxu0 0.0
        %1352 = vmatpush.xpose.msra.mxu0 0.0
        %1353 = vmatpush.xpose.msra.mxu0 %v1336
        %1354 = vmatmul.f32.gmra.mxu0 %v1334
        %v1355 = vpop.f32.mrf.mxu0
        %v1356 = vadd.f32 0.0, %v1355
        %1357 = vdwg.mxu0
        %v1358 = vsel %vm826, %v1278, 0
        %v1360 = vsel %vm826, %v1285, 0
        %1362 = vmatpush.xpose.msra.mxu0 0.0
        %1363 = vmatpush.xpose.msra.mxu0 0.0
        %1364 = vmatpush.xpose.msra.mxu0 0.0
        %1365 = vmatpush.xpose.msra.mxu0 0.0
        %1366 = vmatpush.xpose.msra.mxu0 0.0
        %1367 = vmatpush.xpose.msra.mxu0 0.0
        %1368 = vmatpush.xpose.msra.mxu0 0.0
        %1369 = vmatpush.xpose.msra.mxu0 0.0
        %1370 = vmatpush.xpose.msra.mxu0 0.0
        %1371 = vmatpush.xpose.msra.mxu0 0.0
        %1372 = vmatpush.xpose.msra.mxu0 0.0
        %1373 = vmatpush.xpose.msra.mxu0 0.0
        %1374 = vmatpush.xpose.msra.mxu0 0.0
        %1375 = vmatpush.xpose.msra.mxu0 0.0
        %1376 = vmatpush.xpose.msra.mxu0 0.0
        %1377 = vmatpush.xpose.msra.mxu0 %v1360
        %1378 = vmatmul.f32.gmra.mxu0 %v1358
        %v1379 = vpop.f32.mrf.mxu0
        %v1380 = vadd.f32 0.0, %v1379
        %1381 = vdwg.mxu0
        %v1382 = vmul.f32 %v1308, 0.35355338
        %v1383 = vmul.f32 %v1332, 0.35355338
        %v1384 = vmul.f32 %v1356, 0.35355338
        %v1385 = vmul.f32 %v1380, 0.35355338
        %v1386 = vsel %vm826, %v1382, -inf
        %1387 = vmax.xlane.f32.xlu0 %v1386
        %v1388 = vpop.xlane.xlu0 %1387
        %v1389 = vsel %vm826, %v1383, -inf
        %1390 = vmax.xlane.f32.xlu0 %v1389
        %v1391 = vpop.xlane.xlu0 %1390
        %v1392 = vsel %vm826, %v1384, -inf
        %1393 = vmax.xlane.f32.xlu0 %v1392
        %v1394 = vpop.xlane.xlu0 %1393
        %v1395 = vsel %vm826, %v1385, -inf
        %1396 = vmax.xlane.f32.xlu0 %v1395
        %v1397 = vpop.xlane.xlu0 %1396
        %v1398 = vsub.f32 %v1382, %v1388
        %v1399 = vsub.f32 %v1383, %v1391
        %v1400 = vsub.f32 %v1384, %v1394
        %v1401 = vsub.f32 %v1385, %v1397
        %v1402 = vmul.f32 %v1398, 1.442695
        %v1403 = vpow.pop %v1402
        %v1404 = vmul.f32 %v1399, 1.442695
        %v1405 = vpow.pop %v1404
        %v1406 = vmul.f32 %v1400, 1.442695
        %v1407 = vpow.pop %v1406
        %v1408 = vmul.f32 %v1401, 1.442695
        %v1409 = vpow.pop %v1408
        %v1410 = vsel %vm826, %v1403, 0.0
        %1411 = vadd.xlane.f32.xlu0 %v1410
        %v1412 = vpop.xlane.xlu0 %1411
        %v1413 = vsel %vm826, %v1405, 0.0
        %1414 = vadd.xlane.f32.xlu0 %v1413
        %v1415 = vpop.xlane.xlu0 %1414
        %v1416 = vsel %vm826, %v1407, 0.0
        %1417 = vadd.xlane.f32.xlu0 %v1416
        %v1418 = vpop.xlane.xlu0 %1417
        %v1419 = vsel %vm826, %v1409, 0.0
        %1420 = vadd.xlane.f32.xlu0 %v1419
        %v1421 = vpop.xlane.xlu0 %1420
        %v1422 = vrcp.pop %v1412
        %v1423 = vrcp.pop %v1415
        %v1424 = vrcp.pop %v1418
        %v1425 = vrcp.pop %v1421
        %v1426 = vmul.f32 %v1403, %v1422
        %v1427 = vmul.f32 %v1405, %v1423
        %v1428 = vmul.f32 %v1407, %v1424
        %v1429 = vmul.f32 %v1409, %v1425
        %1430 = vrot.lane.b32.xlu0 %v1270, 96
        %v1431 = vpop.permute.xlu0 %1430
        %v1434 = vsel %vm826, %v1426, 0
        %1436 = vmatpush.msra.mxu0 0.0
        %1437 = vmatpush.msra.mxu0 0.0
        %1438 = vmatpush.msra.mxu0 0.0
        %1439 = vmatpush.msra.mxu0 0.0
        %1440 = vmatpush.msra.mxu0 0.0
        %1441 = vmatpush.msra.mxu0 0.0
        %1442 = vmatpush.msra.mxu0 0.0
        %1443 = vmatpush.msra.mxu0 0.0
        %1444 = vmatpush.msra.mxu0 0.0
        %1445 = vmatpush.msra.mxu0 0.0
        %1446 = vmatpush.msra.mxu0 0.0
        %1447 = vmatpush.msra.mxu0 0.0
        %1448 = vmatpush.msra.mxu0 0.0
        %1449 = vmatpush.msra.mxu0 0.0
        %1450 = vmatpush.msra.mxu0 0.0
        %1451 = vmatpush.msra.mxu0 %v1431
        %1452 = vmatmul.f32.gmra.mxu0 %v1434
        %v1453 = vpop.f32.mrf.mxu0
        %v1454 = vadd.f32 0.0, %v1453
        %1455 = vdwg.mxu0
        %1456 = vrot.lane.b32.xlu0 %v1281, 96
        %v1457 = vpop.permute.xlu0 %1456
        %v1460 = vsel %vm826, %v1427, 0
        %1462 = vmatpush.msra.mxu0 0.0
        %1463 = vmatpush.msra.mxu0 0.0
        %1464 = vmatpush.msra.mxu0 0.0
        %1465 = vmatpush.msra.mxu0 0.0
        %1466 = vmatpush.msra.mxu0 0.0
        %1467 = vmatpush.msra.mxu0 0.0
        %1468 = vmatpush.msra.mxu0 0.0
        %1469 = vmatpush.msra.mxu0 0.0
        %1470 = vmatpush.msra.mxu0 0.0
        %1471 = vmatpush.msra.mxu0 0.0
        %1472 = vmatpush.msra.mxu0 0.0
        %1473 = vmatpush.msra.mxu0 0.0
        %1474 = vmatpush.msra.mxu0 0.0
        %1475 = vmatpush.msra.mxu0 0.0
        %1476 = vmatpush.msra.mxu0 0.0
        %1477 = vmatpush.msra.mxu0 %v1457
        %1478 = vmatmul.f32.gmra.mxu0 %v1460
        %v1479 = vpop.f32.mrf.mxu0
        %v1480 = vadd.f32 0.0, %v1479
        %1481 = vdwg.mxu0
        %1482 = vrot.lane.b32.xlu0 %v1283, 96
        %v1483 = vpop.permute.xlu0 %1482
        %v1486 = vsel %vm826, %v1428, 0
        %1488 = vmatpush.msra.mxu0 0.0
        %1489 = vmatpush.msra.mxu0 0.0
        %1490 = vmatpush.msra.mxu0 0.0
        %1491 = vmatpush.msra.mxu0 0.0
        %1492 = vmatpush.msra.mxu0 0.0
        %1493 = vmatpush.msra.mxu0 0.0
        %1494 = vmatpush.msra.mxu0 0.0
        %1495 = vmatpush.msra.mxu0 0.0
        %1496 = vmatpush.msra.mxu0 0.0
        %1497 = vmatpush.msra.mxu0 0.0
        %1498 = vmatpush.msra.mxu0 0.0
        %1499 = vmatpush.msra.mxu0 0.0
        %1500 = vmatpush.msra.mxu0 0.0
        %1501 = vmatpush.msra.mxu0 0.0
        %1502 = vmatpush.msra.mxu0 0.0
        %1503 = vmatpush.msra.mxu0 %v1483
        %1504 = vmatmul.f32.gmra.mxu0 %v1486
        %v1505 = vpop.f32.mrf.mxu0
        %v1506 = vadd.f32 0.0, %v1505
        %1507 = vdwg.mxu0
        %1508 = vrot.lane.b32.xlu0 %v1285, 96
        %v1509 = vpop.permute.xlu0 %1508
        %v1512 = vsel %vm826, %v1429, 0
        %1514 = vmatpush.msra.mxu0 0.0
        %1515 = vmatpush.msra.mxu0 0.0
        %1516 = vmatpush.msra.mxu0 0.0
        %1517 = vmatpush.msra.mxu0 0.0
        %1518 = vmatpush.msra.mxu0 0.0
        %1519 = vmatpush.msra.mxu0 0.0
        %1520 = vmatpush.msra.mxu0 0.0
        %1521 = vmatpush.msra.mxu0 0.0
        %1522 = vmatpush.msra.mxu0 0.0
        %1523 = vmatpush.msra.mxu0 0.0
        %1524 = vmatpush.msra.mxu0 0.0
        %1525 = vmatpush.msra.mxu0 0.0
        %1526 = vmatpush.msra.mxu0 0.0
        %1527 = vmatpush.msra.mxu0 0.0
        %1528 = vmatpush.msra.mxu0 0.0
        %1529 = vmatpush.msra.mxu0 %v1509
        %1530 = vmatmul.f32.gmra.mxu0 %v1512
        %v1531 = vpop.f32.mrf.mxu0
        %v1532 = vadd.f32 0.0, %v1531
        %1533 = vdwg.mxu0
        %1535 = vrot.lane.b32.xlu0 %v1480, 8
        %v1536 = vpop.permute.xlu0 %1535
        %1539 = vrot.lane.b32.xlu0 %v1506, 16
        %v1540 = vpop.permute.xlu0 %1539
        %1543 = vrot.lane.b32.xlu0 %v1532, 24
        %v1544 = vpop.permute.xlu0 %1543
        %v1546 = vsel %vm826, %v1454, %v1536
        %v1547 = vsel %vm1164, %v1546, %v1540
        %v1548 = vsel %vm1166, %v1547, %v1544
        %v1549 = vld [vmem:[#allocation6] sm:$0xff]
        %v1550 = vld [vmem:[#allocation6 + $0x8] sm:$0xff]
        %v1551 = vld [vmem:[#allocation6 + $0x10] sm:$0xff]
        %v1552 = vld [vmem:[#allocation6 + $0x18] sm:$0xff]
        %v1553 = vld [vmem:[%s14] sm:$0x1]
        %v1555 = vperm.slane %v1553, 0
        %v1558 = vsel %vm794, %v1548, 0
        %1560 = vmatpush.msra.mxu0 0.0
        %1561 = vmatpush.msra.mxu0 0.0
        %1562 = vmatpush.msra.mxu0 0.0
        %1563 = vmatpush.msra.mxu0 0.0
        %1564 = vmatpush.msra.mxu0 0.0
        %1565 = vmatpush.msra.mxu0 0.0
        %1566 = vmatpush.msra.mxu0 0.0
        %1567 = vmatpush.msra.mxu0 0.0
        %1568 = vmatpush.msra.mxu0 0.0
        %1569 = vmatpush.msra.mxu0 0.0
        %1570 = vmatpush.msra.mxu0 0.0
        %1571 = vmatpush.msra.mxu0 0.0
        %1572 = vmatpush.msra.mxu0 %v1552
        %1573 = vmatpush.msra.mxu0 %v1551
        %1574 = vmatpush.msra.mxu0 %v1550
        %1575 = vmatpush.msra.mxu0 %v1549
        %1576 = vmatmul.f32.gmra.mxu0 %v1558
        %v1577 = vpop.f32.mrf.mxu0
        %v1578 = vadd.f32 %v1555, %v1577
        %1579 = vdwg.mxu0
        %v1580 = vadd.f32 %v1208, %v1578
        %v1581 = vsel %vm794, %v1580, 0.0
        %1582 = vadd.xlane.f32.xlu0 %v1581
        %v1583 = vpop.xlane.xlu0 %1582
        %v1584 = vmul.f32 %v1583, %v804
        %v1585 = vsub.f32 %v1580, %v1584
        %v1586 = vmul.f32 %v1585, %v1585
        %v1587 = vsel %vm794, %v1586, 0.0
        %1588 = vadd.xlane.f32.xlu0 %v1587
        %v1589 = vpop.xlane.xlu0 %1588
        %v1590 = vmul.f32 %v1589, %v804
        %v1591 = vadd.f32 %v1590, 1e-06
        %v1592 = vrsqrt.pop %v1591
        %v1593 = vmul.f32 %v1592, %v1591
        %v1594 = vmul.f32 %v1593, %v1592
        %v1595 = vmul.f32 0.5, %v1594
        %v1596 = vsub.f32 1.5, %v1595
        %v1597 = vmul.f32 %v1592, %v1596
        %vm1598 = vweird.f32 %v1591
        %vm1599 = vweird.f32 %v1592
        %vm1600 = vmor %vm1598, %vm1599
        %v1601 = vsel %vm1600, %v1592, %v1597
        %v1602 = vmul.f32 %v1585, %v1601
        %v1603 = vld [vmem:[%s784] sm:$0xff]
        %v1604 = vld [vmem:[%s671] sm:$0xff]
        %v1606 = vsel %vm826, %v1603, 0
        %1608 = vmatpush.msra.mxu0 0.0
        %1609 = vmatpush.msra.mxu0 0.0
        %1610 = vmatpush.msra.mxu0 0.0
        %1611 = vmatpush.msra.mxu0 0.0
        %1612 = vmatpush.msra.mxu0 0.0
        %1613 = vmatpush.msra.mxu0 0.0
        %1614 = vmatpush.msra.mxu0 0.0
        %1615 = vmatpush.msra.mxu0 0.0
        %1616 = vmatpush.msra.mxu0 0.0
        %1617 = vmatpush.msra.mxu0 0.0
        %1618 = vmatpush.msra.mxu0 0.0
        %1619 = vmatpush.msra.mxu0 0.0
        %1620 = vmatpush.msra.mxu0 0.0
        %1621 = vmatpush.msra.mxu0 0.0
        %1622 = vmatpush.msra.mxu0 0.0
        %1623 = vmatpush.msra.mxu0 %v1604
        %1624 = vmatmul.f32.gmra.mxu0 %v1606
        %v1625 = vpop.f32.mrf.mxu0
        %v1626 = vadd.f32 0.0, %v1625
        %1627 = vdwg.mxu0
        %v1628 = vadd.f32 %v1626, 1.0
        %1630 = vrot.lane.b32.xlu0 %v1628, 96
        %v1631 = vpop.permute.xlu0 %1630
        %v1633 = vmul.f32 %v1602, %v1631
        %v1634 = vadd.f32 %v1633, %v1626
        %v1635 = vld [vmem:[#allocation7] sm:$0xff]
        %v1636 = vld [vmem:[#allocation7 + $0x8] sm:$0xff]
        %v1637 = vld [vmem:[#allocation7 + $0x10] sm:$0xff]
        %v1638 = vld [vmem:[#allocation7 + $0x18] sm:$0xff]
        %v1639 = vld [vmem:[%s16] sm:$0x1]
        %v1641 = vperm.slane %v1639, 0
        %v1644 = vsel %vm794, %v1634, 0
        %1646 = vmatpush.msra.mxu0 0.0
        %1647 = vmatpush.msra.mxu0 0.0
        %1648 = vmatpush.msra.mxu0 0.0
        %1649 = vmatpush.msra.mxu0 0.0
        %1650 = vmatpush.msra.mxu0 0.0
        %1651 = vmatpush.msra.mxu0 0.0
        %1652 = vmatpush.msra.mxu0 0.0
        %1653 = vmatpush.msra.mxu0 0.0
        %1654 = vmatpush.msra.mxu0 0.0
        %1655 = vmatpush.msra.mxu0 0.0
        %1656 = vmatpush.msra.mxu0 0.0
        %1657 = vmatpush.msra.mxu0 0.0
        %1658 = vmatpush.msra.mxu0 %v1638
        %1659 = vmatpush.msra.mxu0 %v1637
        %1660 = vmatpush.msra.mxu0 %v1636
        %1661 = vmatpush.msra.mxu0 %v1635
        %1662 = vmatmul.f32.gmra.mxu0 %v1644
        %v1663 = vpop.f32.mrf.mxu0
        %v1664 = vadd.f32 %v1641, %v1663
        %1665 = vdwg.mxu0
        %v1666 = vmul.f32 %v1664, %v1664
        %v1667 = vmul.f32 %v1664, %v1666
        %v1668 = vmul.f32 %v1667, 0.044715
        %v1669 = vadd.f32 %v1664, %v1668
        %v1670 = vmul.f32 %v1669, 0.7978846
        %v1671 = vtanh.pop %v1670
        %v1672 = vadd.f32 %v1671, 1.0
        %v1673 = vmul.f32 %v1672, 0.5
        %v1674 = vmul.f32 %v1664, %v1673
        %v1675 = vld [vmem:[%s17] sm:$0xff]
        %v1676 = vld [vmem:[%s17 + $0x8] sm:$0xff]
        %v1677 = vld [vmem:[%s17 + $0x10] sm:$0xff]
        %v1678 = vld [vmem:[%s17 + $0x18] sm:$0xff]
        %v1679 = vld [vmem:[%s17 + $0x20] sm:$0xff]
        %v1680 = vld [vmem:[%s17 + $0x28] sm:$0xff]
        %v1681 = vld [vmem:[%s17 + $0x30] sm:$0xff]
        %v1682 = vld [vmem:[%s17 + $0x38] sm:$0xff]
        %v1683 = vld [vmem:[%s17 + $0x40] sm:$0xff]
        %v1684 = vld [vmem:[%s17 + $0x48] sm:$0xff]
        %v1685 = vld [vmem:[%s17 + $0x50] sm:$0xff]
        %v1686 = vld [vmem:[%s17 + $0x58] sm:$0xff]
        %v1687 = vld [vmem:[%s17 + $0x60] sm:$0xff]
        %v1688 = vld [vmem:[%s17 + $0x68] sm:$0xff]
        %v1689 = vld [vmem:[%s17 + $0x70] sm:$0xff]
        %v1690 = vld [vmem:[%s17 + $0x78] sm:$0xff]
        %v1691 = vld [vmem:[%s18] sm:$0x1]
        %v1693 = vperm.slane %v1691, 0
        %1695 = vmatpush.msra.mxu0 %v1690
        %1696 = vmatpush.msra.mxu0 %v1689
        %1697 = vmatpush.msra.mxu0 %v1688
        %1698 = vmatpush.msra.mxu0 %v1687
        %1699 = vmatpush.msra.mxu0 %v1686
        %1700 = vmatpush.msra.mxu0 %v1685
        %1701 = vmatpush.msra.mxu0 %v1684
        %1702 = vmatpush.msra.mxu0 %v1683
        %1703 = vmatpush.msra.mxu0 %v1682
        %1704 = vmatpush.msra.mxu0 %v1681
        %1705 = vmatpush.msra.mxu0 %v1680
        %1706 = vmatpush.msra.mxu0 %v1679
        %1707 = vmatpush.msra.mxu0 %v1678
        %1708 = vmatpush.msra.mxu0 %v1677
        %1709 = vmatpush.msra.mxu0 %v1676
        %1710 = vmatpush.msra.mxu0 %v1675
        %1711 = vmatmul.f32.gmra.mxu0 %v1674
        %v1712 = vpop.f32.mrf.mxu0
        %v1713 = vadd.f32 %v1693, %v1712
        %1714 = vdwg.mxu0
        %1716 = vrot.lane.b32.xlu0 %v1713, 64
        %v1717 = vpop.permute.xlu0 %1716
        %v1719 = vmul.f32 %v1626, %v1717
        %1721 = vrot.lane.b32.xlu0 %v1719, 64
        %v1722 = vpop.permute.xlu0 %1721
        %v1724 = vadd.f32 %v1580, %v1722
        %1725 = vst.msk [vmem:[%s792] sm:$0xff] %vm794, %v1724
        %p1726 = scmp.lt.s32.totalorder %s41, 1
        %s1727 = scalar_select %p1726, %s41, 1
        %p1728 = scmp.lt.s32.totalorder %s42, 7
        %s1729 = scalar_select %p1728, %s42, 7
        %s1730 = smul.addr %s1727, 8
        %s1731 = sadd.s32 %s1729, %s1730
        %s1732 = smul.addr %s1731, 8
        %s1733 = scalar_lea.vmem %s19, %s1732
        // Predicated region
        $region113: #{tpu_custom_call.1} parent=95 // pred_check
          %p1734 = pneg %p497
        $region114: #{tpu_custom_call.1} parent=95 // pred_check_branch
          %1736 = sbr.rel (%p1734) target = $region116
        $region115: #{tpu_custom_call.1} parent=95 // pred_region
          _
        $region116: #{tpu_custom_call.1} parent=95 // pred_fallthru
          _
      $region96: #{tpu_custom_call.1} parent=5 // pred_fallthru
        _
      %p1737 = scmp.le.s32.totalorder 2, %s32
      // Predicated region
      $region117: #{tpu_custom_call.1} parent=5 // pred_check
        %p1738 = pneg %p1737
      $region118: #{tpu_custom_call.1} parent=5 // pred_check_branch
        %1740 = sbr.rel (%p1738) target = $region120
      $region119: #{tpu_custom_call.1} parent=5 // pred_region
        %s1741 = ssub.s32 %s32, 2
        // Predicated region
        $region121: #{tpu_custom_call.1} parent=119 // pred_check
          %p1742 = pneg %p503
        $region122: #{tpu_custom_call.1} parent=119 // pred_check_branch
          %1744 = sbr.rel (%p1742) target = $region124
        $region123: #{tpu_custom_call.1} parent=119 // pred_region
          %p1745 = scmp.lt.s32.totalorder %s43, 1
          %s1746 = scalar_select %p1745, %s43, 1
          %p1747 = scmp.lt.s32.totalorder %s44, 7
          %s1748 = scalar_select %p1747, %s44, 7
          %s1749 = smul.addr %s1746, 8
          %s1750 = sadd.s32 %s1748, %s1749
          %s1751 = smul.addr %s1750, 8
          %s1752 = scalar_lea.vmem %s19, %s1751
        $region124: #{tpu_custom_call.1} parent=119 // pred_fallthru
          _
      $region120: #{tpu_custom_call.1} parent=5 // pred_fallthru
        _
    $region6: #{tpu_custom_call.1} parent=1 // loop_footer
      %s36 = sadd.s32 1, %s32
    $region7: #{tpu_custom_call.1} parent=1 // loop_footer_branch
      %31 = sbr.rel target = $region3
    $region8: #{tpu_custom_call.1} parent=1 // loop_exit
      _
    %1753 = vsyncpa [#allocation3], 1
    %s1754 = scalar_lea.sflag [#allocation3], 1
    %1755 = vsyncpa %s1754, 1
    %1756 = vsyncpa [#allocation5], 1
    %s1757 = scalar_lea.sflag [#allocation5], 1
    %1758 = vsyncpa %s1757, 1
    %1759 = vsyncpa [#allocation8], 1

</llo_original>
